<compile_context>
chip_gen: v7x
topology: tpu7x:2x2x1
jax: 0.10.0
libtpu: 0.0.40
codegen_flags: <defaults>
</compile_context>

<pallas_src>
import math
import numpy as np
import jax
import jax.numpy as jnp
from jax.experimental import pallas as pl
from jax.experimental.pallas import tpu as pltpu

# ---------------- problem sizes (small, consistent with the module) ----------------
B = 2          # batch
N = 8          # input_node_num
D = 16         # input_feature_size (d_model), nhead=2 -> head_dim=8
NHEAD = 2
HD = D // NHEAD
H = 32         # dim_feedforward (hidden_size)
K = 4          # output_node_num (cluster_number)
EH = 32        # DEC encoder hidden size (hard-coded 32 in the module)
ND = N * D     # 128
EPS = 1e-5     # LayerNorm eps (PyTorch default)
OUT_W = 128    # lane-dense packed output width:  K*D (64) | N*K (32) | pad (32)

assert H == EH, "w2/e2w/e3w share a 32-row input dim for packing"

# ---------------- packed small-vector layout (one (1, VEC_TOTAL) input) ----------------
_VEC_LAYOUT = (("e3b", ND), ("bqkv", 3 * D), ("bo", D), ("ln1w", D), ("ln1b", D),
               ("ln2w", D), ("ln2b", D), ("b1", H), ("b2", D),
               ("e1b", EH), ("e2b", EH), ("inv_cnorm", K))
_VEC_OFF = {}
_off = 0
for _name, _size in _VEC_LAYOUT:
    _VEC_OFF[_name] = (_off, _size)
    _off += _size
VEC_TOTAL = _off  # 372


# ---------------- small in-kernel helpers ----------------
def _layernorm(x, w, b):
    mu = jnp.mean(x, axis=-1, keepdims=True)
    var = jnp.mean((x - mu) ** 2, axis=-1, keepdims=True)
    return (x - mu) * jax.lax.rsqrt(var + EPS) * w + b


def _leaky(x):
    return jnp.where(x > 0, x, 0.01 * x)          # LeakyReLU(0.01)


def _softmax_lastdim(s):
    m = jnp.max(s, axis=-1, keepdims=True)
    e = jnp.exp(s - m)
    return e * pl.reciprocal(jnp.sum(e, axis=-1, keepdims=True), approx=True)


def _rows_to_lanes(a):
    # (r, c) -> (1, r*c), row-major, via lane concatenation (no sublane->lane reshape).
    return jnp.concatenate([a[i:i + 1, :] for i in range(a.shape[0])], axis=-1)


def _lanes_to_rows(a, r, c):
    # (1, r*c) -> (r, c), row-major, via sublane concatenation of lane slices.
    return jnp.concatenate([a[:, i * c:(i + 1) * c] for i in range(r)], axis=0)


# ------------------------- fused kernel -------------------------
def fused_kernel(x_ref, wd16_ref, wd32_ref, e1w_ref, centT_ref, vec_ref, out_ref):
    def vec(name):
        off, size = _VEC_OFF[name]
        return vec_ref[:, off:off + size]          # (1, size)

    # packed weight slices (all share an input dim -> single DMA each)
    wqkv = wd16_ref[:, 0:3 * D]                    # (D, 3D)
    wo = wd16_ref[:, 3 * D:4 * D]                  # (D, D)
    w1 = wd16_ref[:, 4 * D:4 * D + H]              # (D, H)
    w2 = wd32_ref[:, 0:D]                          # (H, D)
    e2w = wd32_ref[:, D:D + EH]                    # (EH, EH)
    e3w = wd32_ref[:, D + EH:D + EH + ND]          # (EH, ND)

    xf = x_ref[...]                                # (B*N, D) — batch folded into rows

    # ---- multi-head self-attention (nhead = 2), batch kept as einsum batch dim ----
    qkv = jnp.dot(xf, wqkv, preferred_element_type=jnp.float32) + vec("bqkv")   # (B*N, 3D)
    scale = 1.0 / math.sqrt(HD)
    head_outs = []
    for h in range(NHEAD):                                         # static unroll
        qh = qkv[:, h * HD:(h + 1) * HD].reshape(B, N, HD)
        kh = qkv[:, D + h * HD:D + (h + 1) * HD].reshape(B, N, HD)
        vh = qkv[:, 2 * D + h * HD:2 * D + (h + 1) * HD].reshape(B, N, HD)
        s = jnp.einsum("bnd,bmd->bnm", qh, kh,
                       preferred_element_type=jnp.float32) * scale              # (B,N,N)
        p = _softmax_lastdim(s)
        oh = jnp.einsum("bnm,bmd->bnd", p, vh,
                        preferred_element_type=jnp.float32)                     # (B,N,HD)
        head_outs.append(oh.reshape(B * N, HD))
    attn = jnp.dot(jnp.concatenate(head_outs, axis=-1), wo,
                   preferred_element_type=jnp.float32) + vec("bo")               # (B*N, D)

    x1 = _layernorm(xf + attn, vec("ln1w"), vec("ln1b"))

    # ---- feed-forward (relu, post-norm) ----
    ff = jnp.maximum(jnp.dot(x1, w1, preferred_element_type=jnp.float32) + vec("b1"), 0.0)
    ff = jnp.dot(ff, w2, preferred_element_type=jnp.float32) + vec("b2")
    x2 = _layernorm(x1 + ff, vec("ln2w"), vec("ln2b"))                            # (B*N, D)

    # ---- DEC encoder MLP on per-sample flattened features (in-kernel flatten) ----
    enc_in = jnp.concatenate(
        [_rows_to_lanes(x2[b * N:(b + 1) * N, :]) for b in range(B)], axis=0)     # (B, ND)
    h1 = _leaky(jnp.dot(enc_in, e1w_ref[...], preferred_element_type=jnp.float32) + vec("e1b"))
    h2 = _leaky(jnp.dot(h1, e2w, preferred_element_type=jnp.float32) + vec("e2b"))
    enc_flat = jnp.dot(h2, e3w, preferred_element_type=jnp.float32) + vec("e3b")  # (B, ND)

    # ---- cluster assignment + pooling, packed into one lane-dense (B, 128) output ----
    inv_cnorm = vec("inv_cnorm")                                                  # (1, K)
    centT = centT_ref[...]                                                        # (D, K)
    pad = jnp.zeros((1, OUT_W - K * D - N * K), jnp.float32)
    out_rows = []
    for b in range(B):                                                            # static (B=2)
        enc_b = _lanes_to_rows(enc_flat[b:b + 1, :], N, D)                        # (N, D)
        a = jnp.maximum(jnp.dot(enc_b, centT, preferred_element_type=jnp.float32), 0.0)
        a = a * inv_cnorm                                                         # relu(.)/||C||
        asn_b = _softmax_lastdim(a)                                               # (N, K)
        # node_repr_b = assignment^T @ encoded, emitted directly lane-flattened (k*D + d)
        nr_flat = jnp.concatenate(
            [jnp.sum(asn_b[:, k:k + 1] * enc_b, axis=0, keepdims=True)
             for k in range(K)], axis=-1)                                         # (1, K*D)
        out_rows.append(jnp.concatenate([nr_flat, _rows_to_lanes(asn_b), pad], axis=-1))
    out_ref[...] = jnp.concatenate(out_rows, axis=0)                              # (B, OUT_W)


# ------------------------- wrapper -------------------------
@jax.jit
def trans_pooling_encoder(x, wd16, wd32, e1w, centersT, vecs):
    xf = x.reshape(B * N, D)          # contiguous view, free at XLA level
    out = pl.pallas_call(
        fused_kernel,
        out_shape=jax.ShapeDtypeStruct((B, OUT_W), jnp.float32),
        grid=(1,),
        in_specs=[
            pl.BlockSpec((B * N, D), lambda i: (0, 0)),
            pl.BlockSpec((D, 3 * D + D + H), lambda i: (0, 0)),
            pl.BlockSpec((H, D + EH + ND), lambda i: (0, 0)),
            pl.BlockSpec((ND, EH), lambda i: (0, 0)),
            pl.BlockSpec((D, K), lambda i: (0, 0)),
            pl.BlockSpec((1, VEC_TOTAL), lambda i: (0, 0)),
        ],
        out_specs=pl.BlockSpec((B, OUT_W), lambda i: (0, 0)),
        compiler_params=pltpu.CompilerParams(dimension_semantics=("arbitrary",)),
    )(xf, wd16, wd32, e1w, centersT, vecs)
    node_repr = out[:, :K * D].reshape(B, K, D)
    assignment = out[:, K * D:K * D + N * K].reshape(B, N, K)
    return node_repr, assignment


# ------------------------- pure-JAX reference (sanity check only) -------------------------
def _reference(x, wd16, wd32, e1w, centersT, vecs):
    def vec(name):
        o, s = _VEC_OFF[name]
        return vecs[:, o:o + s]
    wqkv, wo, w1 = wd16[:, :3 * D], wd16[:, 3 * D:4 * D], wd16[:, 4 * D:]
    w2, e2w, e3w = wd32[:, :D], wd32[:, D:D + EH], wd32[:, D + EH:]
    xf = x.reshape(B * N, D)
    qkv = xf @ wqkv + vec("bqkv")
    q = qkv[:, :D].reshape(B, N, NHEAD, HD)
    k = qkv[:, D:2 * D].reshape(B, N, NHEAD, HD)
    v = qkv[:, 2 * D:].reshape(B, N, NHEAD, HD)
    s = jnp.einsum("bnhd,bmhd->bhnm", q, k) / math.sqrt(HD)
    p = jax.nn.softmax(s, axis=-1)
    o = jnp.einsum("bhnm,bmhd->bnhd", p, v).reshape(B * N, D)
    attn = o @ wo + vec("bo")
    x1 = _layernorm(xf + attn, vec("ln1w"), vec("ln1b"))
    ff = jnp.maximum(x1 @ w1 + vec("b1"), 0.0) @ w2 + vec("b2")
    x2 = _layernorm(x1 + ff, vec("ln2w"), vec("ln2b"))
    flat = x2.reshape(B, ND)
    h = jax.nn.leaky_relu(flat @ e1w + vec("e1b"))
    h = jax.nn.leaky_relu(h @ e2w + vec("e2b"))
    enc = (h @ e3w + vec("e3b")).reshape(B, N, D)
    a = jnp.maximum(jnp.einsum("bnd,dk->bnk", enc, centersT), 0.0) * vec("inv_cnorm")
    asn = jax.nn.softmax(a, axis=-1)
    nr = jnp.einsum("bnk,bnd->bkd", asn, enc)
    return nr, asn


# ------------------------- deterministic parameter init (pre-packed) -------------------------
def init_params(key):
    ks = jax.random.split(key, 16)

    def u(k, shape, fan_in):
        bound = 1.0 / math.sqrt(fan_in)
        return jax.random.uniform(k, shape, jnp.float32, -bound, bound)

    wqkv = u(ks[0], (D, 3 * D), D)       # in_proj_weight.T
    bqkv = u(ks[1], (1, 3 * D), D)
    wo = u(ks[2], (D, D), D)             # out_proj.weight.T
    bo = u(ks[3], (1, D), D)
    ln1w = jnp.ones((1, D), jnp.float32); ln1b = jnp.zeros((1, D), jnp.float32)
    ln2w = jnp.ones((1, D), jnp.float32); ln2b = jnp.zeros((1, D), jnp.float32)
    w1 = u(ks[4], (D, H), D);   b1 = u(ks[5], (1, H), D)
    w2 = u(ks[6], (H, D), H);   b2 = u(ks[7], (1, D), H)
    e1w = u(ks[8], (ND, EH), ND);   e1b = u(ks[9], (1, EH), ND)
    e2w = u(ks[10], (EH, EH), EH);  e2b = u(ks[11], (1, EH), EH)
    e3w = u(ks[12], (EH, ND), EH);  e3b = u(ks[13], (1, ND), EH)

    # cluster centers: xavier-uniform init then Gram-Schmidt orthogonalization
    # (orthogonal=True; first vector kept un-normalized as in the module code)
    bound = math.sqrt(6.0 / (K + D))
    c0 = np.array(jax.random.uniform(ks[14], (K, D), jnp.float32, -bound, bound))
    centers = np.zeros_like(c0)
    centers[0] = c0[0]
    for i in range(1, K):
        proj = np.zeros(D, np.float32)
        for j in range(i):
            uj = c0[j]
            proj += (np.dot(uj, c0[i]) / np.dot(uj, uj)) * uj
        c0[i] = c0[i] - proj
        centers[i] = c0[i] / np.linalg.norm(c0[i])
    inv_cnorm = (1.0 / np.linalg.norm(centers, axis=-1)).reshape(1, K).astype(np.float32)

    # ---- pack once at init (not per call): weights sharing an input dim + all small vectors ----
    wd16 = jnp.concatenate([wqkv, wo, w1], axis=1)                 # (16, 96)
    wd32 = jnp.concatenate([w2, e2w, e3w], axis=1)                 # (32, 176)
    centersT = jnp.asarray(centers.T, jnp.float32)                 # (D, K)
    parts = dict(e3b=e3b, bqkv=bqkv, bo=bo, ln1w=ln1w, ln1b=ln1b, ln2w=ln2w,
                 ln2b=ln2b, b1=b1, b2=b2, e1b=e1b, e2b=e2b,
                 inv_cnorm=jnp.asarray(inv_cnorm))
    vecs = jnp.concatenate([parts[name] for name, _ in _VEC_LAYOUT], axis=-1)   # (1, 372)
    return wd16, wd32, e1w, centersT, vecs


if __name__ == "__main__":
    key = jax.random.PRNGKey(0)
    kx, kp = jax.random.split(key)
    x = jax.random.normal(kx, (B, N, D), jnp.float32)
    params = init_params(kp)

    node_repr, assignment = trans_pooling_encoder(x, *params)
    jax.block_until_ready((node_repr, assignment))

    assert node_repr.shape == (B, K, D)
    assert assignment.shape == (B, N, K)
    assert bool(jnp.all(jnp.isfinite(node_repr))) and bool(jnp.all(jnp.isfinite(assignment)))
    # assignment rows are softmax-normalized over clusters (approx reciprocal -> loose tol)
    assert bool(jnp.allclose(jnp.sum(assignment, axis=-1), 1.0, atol=1e-2))

    # sanity check against a pure-JAX reference of the same math (loose tol: approx rcp in softmax)
    ref_nr, ref_asn = _reference(x, *params)
    assert float(jnp.max(jnp.abs(node_repr - ref_nr))) < 5e-2
    assert float(jnp.max(jnp.abs(assignment - ref_asn))) < 5e-2

    print("KERNEL_OK")
</pallas_src>

<mosaic_0001>
module attributes {stable_mosaic.version = 11 : i64} {
  func.func @fused_kernel(%arg0: i32, %arg1: memref<16x16xf32, #tpu.memory_space<vmem>>, %arg2: memref<16x96xf32, #tpu.memory_space<vmem>>, %arg3: memref<32x176xf32, #tpu.memory_space<vmem>>, %arg4: memref<128x32xf32, #tpu.memory_space<vmem>>, %arg5: memref<16x4xf32, #tpu.memory_space<vmem>>, %arg6: memref<1x372xf32, #tpu.memory_space<vmem>>, %arg7: memref<2x128xf32, #tpu.memory_space<vmem>>) attributes {dimension_semantics = [#tpu.dimension_semantics<arbitrary>], iteration_bounds = array<i64: 1>, scalar_prefetch = 0 : i64, scratch_operands = 0 : i64, tpu.core_type = #tpu.core_type<tc>, window_params = [{pipeline_mode = #tpu.pipeline_mode<synchronous>, transform_indices = @transform_0, window_bounds = array<i64: 16, 16>}, {pipeline_mode = #tpu.pipeline_mode<synchronous>, transform_indices = @transform_1, window_bounds = array<i64: 16, 96>}, {pipeline_mode = #tpu.pipeline_mode<synchronous>, transform_indices = @transform_2, window_bounds = array<i64: 32, 176>}, {pipeline_mode = #tpu.pipeline_mode<synchronous>, transform_indices = @transform_3, window_bounds = array<i64: 128, 32>}, {pipeline_mode = #tpu.pipeline_mode<synchronous>, transform_indices = @transform_4, window_bounds = array<i64: 16, 4>}, {pipeline_mode = #tpu.pipeline_mode<synchronous>, transform_indices = @transform_5, window_bounds = array<i64: 1, 372>}, {pipeline_mode = #tpu.pipeline_mode<synchronous>, transform_indices = @transform_6, window_bounds = array<i64: 2, 128>}]} {
    %c0 = arith.constant 0 : index
    %c0_0 = arith.constant 0 : index
    %0 = vector.load %arg2[%c0, %c0_0] : memref<16x96xf32, #tpu.memory_space<vmem>>, vector<16x48xf32>
    %c0_1 = arith.constant 0 : index
    %c48 = arith.constant 48 : index
    %1 = vector.load %arg2[%c0_1, %c48] : memref<16x96xf32, #tpu.memory_space<vmem>>, vector<16x16xf32>
    %c0_2 = arith.constant 0 : index
    %c64 = arith.constant 64 : index
    %2 = vector.load %arg2[%c0_2, %c64] : memref<16x96xf32, #tpu.memory_space<vmem>>, vector<16x32xf32>
    %c0_3 = arith.constant 0 : index
    %c0_4 = arith.constant 0 : index
    %3 = vector.load %arg3[%c0_3, %c0_4] : memref<32x176xf32, #tpu.memory_space<vmem>>, vector<32x16xf32>
    %c0_5 = arith.constant 0 : index
    %c16 = arith.constant 16 : index
    %4 = vector.load %arg3[%c0_5, %c16] : memref<32x176xf32, #tpu.memory_space<vmem>>, vector<32x32xf32>
    %c0_6 = arith.constant 0 : index
    %c48_7 = arith.constant 48 : index
    %5 = vector.load %arg3[%c0_6, %c48_7] : memref<32x176xf32, #tpu.memory_space<vmem>>, vector<32x128xf32>
    %c0_8 = arith.constant 0 : index
    %c0_9 = arith.constant 0 : index
    %6 = vector.load %arg1[%c0_8, %c0_9] : memref<16x16xf32, #tpu.memory_space<vmem>>, vector<16x16xf32>
    %cst = arith.constant dense<0.000000e+00> : vector<16x48xf32>
    %7 = tpu.matmul %6, %0, %cst {dimension_numbers = #tpu.dot_dimension_numbers<[1], [0], [0], [1], [0, 0, 1, 1], [], []>} : vector<16x16xf32>, vector<16x48xf32>, vector<16x48xf32> -> vector<16x48xf32>
    %c0_10 = arith.constant 0 : index
    %c128 = arith.constant 128 : index
    %8 = vector.load %arg6[%c0_10, %c128] : memref<1x372xf32, #tpu.memory_space<vmem>>, vector<1x48xf32>
    %9 = vector.broadcast %8 : vector<1x48xf32> to vector<16x48xf32>
    %10 = arith.addf %7, %9 : vector<16x48xf32>
    %11 = vector.extract_strided_slice %10 {offsets = [0, 0], sizes = [16, 8], strides = [1, 1]} : vector<16x48xf32> to vector<16x8xf32>
    %12 = vector.shape_cast %11 : vector<16x8xf32> to vector<2x8x8xf32>
    %13 = vector.extract_strided_slice %10 {offsets = [0, 16], sizes = [16, 8], strides = [1, 1]} : vector<16x48xf32> to vector<16x8xf32>
    %14 = vector.shape_cast %13 : vector<16x8xf32> to vector<2x8x8xf32>
    %15 = vector.extract_strided_slice %10 {offsets = [0, 32], sizes = [16, 8], strides = [1, 1]} : vector<16x48xf32> to vector<16x8xf32>
    %16 = vector.shape_cast %15 : vector<16x8xf32> to vector<2x8x8xf32>
    "tpu.trace_start"() <{level = 10 : i32, message = "bnd,bmd->bnm"}> : () -> ()
    %cst_11 = arith.constant dense<0.000000e+00> : vector<2x8x8xf32>
    %17 = tpu.matmul %12, %14, %cst_11 {dimension_numbers = #tpu.dot_dimension_numbers<[2], [2], [1], [1], [0, 0, 0, 1, 1, 1], [0], [0]>} : vector<2x8x8xf32>, vector<2x8x8xf32>, vector<2x8x8xf32> -> vector<2x8x8xf32>
    "tpu.trace_stop"() : () -> ()
    %cst_12 = arith.constant 0.353553385 : f32
    %18 = vector.broadcast %cst_12 : f32 to vector<2x8x8xf32>
    %19 = arith.mulf %17, %18 : vector<2x8x8xf32>
    %cst_13 = arith.constant dense<0xFF800000> : vector<2x8xf32>
    %20 = vector.multi_reduction <maximumf>, %19, %cst_13 [2] : vector<2x8x8xf32> to vector<2x8xf32>
    %21 = vector.shape_cast %20 : vector<2x8xf32> to vector<2x8x1xf32>
    %22 = vector.broadcast %21 : vector<2x8x1xf32> to vector<2x8x8xf32>
    %23 = arith.subf %19, %22 : vector<2x8x8xf32>
    %24 = math.exp %23 : vector<2x8x8xf32>
    %cst_14 = arith.constant dense<0.000000e+00> : vector<2x8xf32>
    %25 = vector.multi_reduction <add>, %24, %cst_14 [2] : vector<2x8x8xf32> to vector<2x8xf32>
    %26 = vector.shape_cast %25 : vector<2x8xf32> to vector<2x8x1xf32>
    %27 = tpu.reciprocal %26 {approx = true} : vector<2x8x1xf32> -> vector<2x8x1xf32>
    %28 = vector.broadcast %27 : vector<2x8x1xf32> to vector<2x8x8xf32>
    %29 = arith.mulf %24, %28 : vector<2x8x8xf32>
    "tpu.trace_start"() <{level = 10 : i32, message = "bnm,bmd->bnd"}> : () -> ()
    %cst_15 = arith.constant dense<0.000000e+00> : vector<2x8x8xf32>
    %30 = tpu.matmul %29, %16, %cst_15 {dimension_numbers = #tpu.dot_dimension_numbers<[2], [1], [1], [2], [0, 0, 0, 1, 1, 2], [0], [0]>} : vector<2x8x8xf32>, vector<2x8x8xf32>, vector<2x8x8xf32> -> vector<2x8x8xf32>
    "tpu.trace_stop"() : () -> ()
    %31 = vector.shape_cast %30 : vector<2x8x8xf32> to vector<16x8xf32>
    %32 = vector.extract_strided_slice %10 {offsets = [0, 8], sizes = [16, 8], strides = [1, 1]} : vector<16x48xf32> to vector<16x8xf32>
    %33 = vector.shape_cast %32 : vector<16x8xf32> to vector<2x8x8xf32>
    %34 = vector.extract_strided_slice %10 {offsets = [0, 24], sizes = [16, 8], strides = [1, 1]} : vector<16x48xf32> to vector<16x8xf32>
    %35 = vector.shape_cast %34 : vector<16x8xf32> to vector<2x8x8xf32>
    %36 = vector.extract_strided_slice %10 {offsets = [0, 40], sizes = [16, 8], strides = [1, 1]} : vector<16x48xf32> to vector<16x8xf32>
    %37 = vector.shape_cast %36 : vector<16x8xf32> to vector<2x8x8xf32>
    "tpu.trace_start"() <{level = 10 : i32, message = "bnd,bmd->bnm"}> : () -> ()
    %cst_16 = arith.constant dense<0.000000e+00> : vector<2x8x8xf32>
    %38 = tpu.matmul %33, %35, %cst_16 {dimension_numbers = #tpu.dot_dimension_numbers<[2], [2], [1], [1], [0, 0, 0, 1, 1, 1], [0], [0]>} : vector<2x8x8xf32>, vector<2x8x8xf32>, vector<2x8x8xf32> -> vector<2x8x8xf32>
    "tpu.trace_stop"() : () -> ()
    %cst_17 = arith.constant 0.353553385 : f32
    %39 = vector.broadcast %cst_17 : f32 to vector<2x8x8xf32>
    %40 = arith.mulf %38, %39 : vector<2x8x8xf32>
    %cst_18 = arith.constant dense<0xFF800000> : vector<2x8xf32>
    %41 = vector.multi_reduction <maximumf>, %40, %cst_18 [2] : vector<2x8x8xf32> to vector<2x8xf32>
    %42 = vector.shape_cast %41 : vector<2x8xf32> to vector<2x8x1xf32>
    %43 = vector.broadcast %42 : vector<2x8x1xf32> to vector<2x8x8xf32>
    %44 = arith.subf %40, %43 : vector<2x8x8xf32>
    %45 = math.exp %44 : vector<2x8x8xf32>
    %cst_19 = arith.constant dense<0.000000e+00> : vector<2x8xf32>
    %46 = vector.multi_reduction <add>, %45, %cst_19 [2] : vector<2x8x8xf32> to vector<2x8xf32>
    %47 = vector.shape_cast %46 : vector<2x8xf32> to vector<2x8x1xf32>
    %48 = tpu.reciprocal %47 {approx = true} : vector<2x8x1xf32> -> vector<2x8x1xf32>
    %49 = vector.broadcast %48 : vector<2x8x1xf32> to vector<2x8x8xf32>
    %50 = arith.mulf %45, %49 : vector<2x8x8xf32>
    "tpu.trace_start"() <{level = 10 : i32, message = "bnm,bmd->bnd"}> : () -> ()
    %cst_20 = arith.constant dense<0.000000e+00> : vector<2x8x8xf32>
    %51 = tpu.matmul %50, %37, %cst_20 {dimension_numbers = #tpu.dot_dimension_numbers<[2], [1], [1], [2], [0, 0, 0, 1, 1, 2], [0], [0]>} : vector<2x8x8xf32>, vector<2x8x8xf32>, vector<2x8x8xf32> -> vector<2x8x8xf32>
    "tpu.trace_stop"() : () -> ()
    %52 = vector.shape_cast %51 : vector<2x8x8xf32> to vector<16x8xf32>
    %53 = tpu.concatenate %31, %52 in 1 : vector<16x8xf32>, vector<16x8xf32> -> vector<16x16xf32>
    %cst_21 = arith.constant dense<0.000000e+00> : vector<16x16xf32>
    %54 = tpu.matmul %53, %1, %cst_21 {dimension_numbers = #tpu.dot_dimension_numbers<[1], [0], [0], [1], [0, 0, 1, 1], [], []>} : vector<16x16xf32>, vector<16x16xf32>, vector<16x16xf32> -> vector<16x16xf32>
    %c0_22 = arith.constant 0 : index
    %c176 = arith.constant 176 : index
    %55 = vector.load %arg6[%c0_22, %c176] : memref<1x372xf32, #tpu.memory_space<vmem>>, vector<1x16xf32>
    %56 = vector.broadcast %55 : vector<1x16xf32> to vector<16x16xf32>
    %57 = arith.addf %54, %56 : vector<16x16xf32>
    %58 = arith.addf %6, %57 : vector<16x16xf32>
    %c0_23 = arith.constant 0 : index
    %c192 = arith.constant 192 : index
    %59 = vector.load %arg6[%c0_23, %c192] : memref<1x372xf32, #tpu.memory_space<vmem>>, vector<1x16xf32>
    %c0_24 = arith.constant 0 : index
    %c208 = arith.constant 208 : index
    %60 = vector.load %arg6[%c0_24, %c208] : memref<1x372xf32, #tpu.memory_space<vmem>>, vector<1x16xf32>
    %cst_25 = arith.constant dense<0.000000e+00> : vector<16xf32>
    %61 = vector.multi_reduction <add>, %58, %cst_25 [1] : vector<16x16xf32> to vector<16xf32>
    %62 = vector.shape_cast %61 : vector<16xf32> to vector<16x1xf32>
    %cst_26 = arith.constant 1.600000e+01 : f32
    %63 = vector.broadcast %cst_26 : f32 to vector<16x1xf32>
    %64 = arith.divf %62, %63 : vector<16x1xf32>
    %65 = vector.broadcast %64 : vector<16x1xf32> to vector<16x16xf32>
    %66 = arith.subf %58, %65 : vector<16x16xf32>
    %67 = arith.mulf %66, %66 : vector<16x16xf32>
    %cst_27 = arith.constant dense<0.000000e+00> : vector<16xf32>
    %68 = vector.multi_reduction <add>, %67, %cst_27 [1] : vector<16x16xf32> to vector<16xf32>
    %69 = vector.shape_cast %68 : vector<16xf32> to vector<16x1xf32>
    %cst_28 = arith.constant 1.600000e+01 : f32
    %70 = vector.broadcast %cst_28 : f32 to vector<16x1xf32>
    %71 = arith.divf %69, %70 : vector<16x1xf32>
    %72 = vector.broadcast %64 : vector<16x1xf32> to vector<16x16xf32>
    %73 = arith.subf %58, %72 : vector<16x16xf32>
    %cst_29 = arith.constant 9.99999974E-6 : f32
    %74 = vector.broadcast %cst_29 : f32 to vector<16x1xf32>
    %75 = arith.addf %71, %74 : vector<16x1xf32>
    %76 = math.rsqrt %75 : vector<16x1xf32>
    %77 = vector.broadcast %76 : vector<16x1xf32> to vector<16x16xf32>
    %78 = arith.mulf %73, %77 : vector<16x16xf32>
    %79 = vector.broadcast %59 : vector<1x16xf32> to vector<16x16xf32>
    %80 = arith.mulf %78, %79 : vector<16x16xf32>
    %81 = vector.broadcast %60 : vector<1x16xf32> to vector<16x16xf32>
    %82 = arith.addf %80, %81 : vector<16x16xf32>
    %cst_30 = arith.constant dense<0.000000e+00> : vector<16x32xf32>
    %83 = tpu.matmul %82, %2, %cst_30 {dimension_numbers = #tpu.dot_dimension_numbers<[1], [0], [0], [1], [0, 0, 1, 1], [], []>} : vector<16x16xf32>, vector<16x32xf32>, vector<16x32xf32> -> vector<16x32xf32>
    %c0_31 = arith.constant 0 : index
    %c256 = arith.constant 256 : index
    %84 = vector.load %arg6[%c0_31, %c256] : memref<1x372xf32, #tpu.memory_space<vmem>>, vector<1x32xf32>
    %85 = vector.broadcast %84 : vector<1x32xf32> to vector<16x32xf32>
    %86 = arith.addf %83, %85 : vector<16x32xf32>
    %cst_32 = arith.constant 0.000000e+00 : f32
    %87 = vector.broadcast %cst_32 : f32 to vector<16x32xf32>
    %88 = arith.maximumf %86, %87 : vector<16x32xf32>
    %cst_33 = arith.constant dense<0.000000e+00> : vector<16x16xf32>
    %89 = tpu.matmul %88, %3, %cst_33 {dimension_numbers = #tpu.dot_dimension_numbers<[1], [0], [0], [1], [0, 0, 1, 1], [], []>} : vector<16x32xf32>, vector<32x16xf32>, vector<16x16xf32> -> vector<16x16xf32>
    %c0_34 = arith.constant 0 : index
    %c288 = arith.constant 288 : index
    %90 = vector.load %arg6[%c0_34, %c288] : memref<1x372xf32, #tpu.memory_space<vmem>>, vector<1x16xf32>
    %91 = vector.broadcast %90 : vector<1x16xf32> to vector<16x16xf32>
    %92 = arith.addf %89, %91 : vector<16x16xf32>
    %93 = arith.addf %82, %92 : vector<16x16xf32>
    %c0_35 = arith.constant 0 : index
    %c224 = arith.constant 224 : index
    %94 = vector.load %arg6[%c0_35, %c224] : memref<1x372xf32, #tpu.memory_space<vmem>>, vector<1x16xf32>
    %c0_36 = arith.constant 0 : index
    %c240 = arith.constant 240 : index
    %95 = vector.load %arg6[%c0_36, %c240] : memref<1x372xf32, #tpu.memory_space<vmem>>, vector<1x16xf32>
    %cst_37 = arith.constant dense<0.000000e+00> : vector<16xf32>
    %96 = vector.multi_reduction <add>, %93, %cst_37 [1] : vector<16x16xf32> to vector<16xf32>
    %97 = vector.shape_cast %96 : vector<16xf32> to vector<16x1xf32>
    %cst_38 = arith.constant 1.600000e+01 : f32
    %98 = vector.broadcast %cst_38 : f32 to vector<16x1xf32>
    %99 = arith.divf %97, %98 : vector<16x1xf32>
    %100 = vector.broadcast %99 : vector<16x1xf32> to vector<16x16xf32>
    %101 = arith.subf %93, %100 : vector<16x16xf32>
    %102 = arith.mulf %101, %101 : vector<16x16xf32>
    %cst_39 = arith.constant dense<0.000000e+00> : vector<16xf32>
    %103 = vector.multi_reduction <add>, %102, %cst_39 [1] : vector<16x16xf32> to vector<16xf32>
    %104 = vector.shape_cast %103 : vector<16xf32> to vector<16x1xf32>
    %cst_40 = arith.constant 1.600000e+01 : f32
    %105 = vector.broadcast %cst_40 : f32 to vector<16x1xf32>
    %106 = arith.divf %104, %105 : vector<16x1xf32>
    %107 = vector.broadcast %99 : vector<16x1xf32> to vector<16x16xf32>
    %108 = arith.subf %93, %107 : vector<16x16xf32>
    %cst_41 = arith.constant 9.99999974E-6 : f32
    %109 = vector.broadcast %cst_41 : f32 to vector<16x1xf32>
    %110 = arith.addf %106, %109 : vector<16x1xf32>
    %111 = math.rsqrt %110 : vector<16x1xf32>
    %112 = vector.broadcast %111 : vector<16x1xf32> to vector<16x16xf32>
    %113 = arith.mulf %108, %112 : vector<16x16xf32>
    %114 = vector.broadcast %94 : vector<1x16xf32> to vector<16x16xf32>
    %115 = arith.mulf %113, %114 : vector<16x16xf32>
    %116 = vector.broadcast %95 : vector<1x16xf32> to vector<16x16xf32>
    %117 = arith.addf %115, %116 : vector<16x16xf32>
    %118 = vector.extract_strided_slice %117 {offsets = [0, 0], sizes = [8, 16], strides = [1, 1]} : vector<16x16xf32> to vector<8x16xf32>
    %119 = vector.extract_strided_slice %118 {offsets = [0, 0], sizes = [1, 16], strides = [1, 1]} : vector<8x16xf32> to vector<1x16xf32>
    %120 = vector.extract_strided_slice %118 {offsets = [1, 0], sizes = [1, 16], strides = [1, 1]} : vector<8x16xf32> to vector<1x16xf32>
    %121 = vector.extract_strided_slice %118 {offsets = [2, 0], sizes = [1, 16], strides = [1, 1]} : vector<8x16xf32> to vector<1x16xf32>
    %122 = vector.extract_strided_slice %118 {offsets = [3, 0], sizes = [1, 16], strides = [1, 1]} : vector<8x16xf32> to vector<1x16xf32>
    %123 = vector.extract_strided_slice %118 {offsets = [4, 0], sizes = [1, 16], strides = [1, 1]} : vector<8x16xf32> to vector<1x16xf32>
    %124 = vector.extract_strided_slice %118 {offsets = [5, 0], sizes = [1, 16], strides = [1, 1]} : vector<8x16xf32> to vector<1x16xf32>
    %125 = vector.extract_strided_slice %118 {offsets = [6, 0], sizes = [1, 16], strides = [1, 1]} : vector<8x16xf32> to vector<1x16xf32>
    %126 = vector.extract_strided_slice %118 {offsets = [7, 0], sizes = [1, 16], strides = [1, 1]} : vector<8x16xf32> to vector<1x16xf32>
    %127 = tpu.concatenate %119, %120, %121, %122, %123, %124, %125, %126 in 1 : vector<1x16xf32>, vector<1x16xf32>, vector<1x16xf32>, vector<1x16xf32>, vector<1x16xf32>, vector<1x16xf32>, vector<1x16xf32>, vector<1x16xf32> -> vector<1x128xf32>
    %128 = vector.extract_strided_slice %117 {offsets = [8, 0], sizes = [8, 16], strides = [1, 1]} : vector<16x16xf32> to vector<8x16xf32>
    %129 = vector.extract_strided_slice %128 {offsets = [0, 0], sizes = [1, 16], strides = [1, 1]} : vector<8x16xf32> to vector<1x16xf32>
    %130 = vector.extract_strided_slice %128 {offsets = [1, 0], sizes = [1, 16], strides = [1, 1]} : vector<8x16xf32> to vector<1x16xf32>
    %131 = vector.extract_strided_slice %128 {offsets = [2, 0], sizes = [1, 16], strides = [1, 1]} : vector<8x16xf32> to vector<1x16xf32>
    %132 = vector.extract_strided_slice %128 {offsets = [3, 0], sizes = [1, 16], strides = [1, 1]} : vector<8x16xf32> to vector<1x16xf32>
    %133 = vector.extract_strided_slice %128 {offsets = [4, 0], sizes = [1, 16], strides = [1, 1]} : vector<8x16xf32> to vector<1x16xf32>
    %134 = vector.extract_strided_slice %128 {offsets = [5, 0], sizes = [1, 16], strides = [1, 1]} : vector<8x16xf32> to vector<1x16xf32>
    %135 = vector.extract_strided_slice %128 {offsets = [6, 0], sizes = [1, 16], strides = [1, 1]} : vector<8x16xf32> to vector<1x16xf32>
    %136 = vector.extract_strided_slice %128 {offsets = [7, 0], sizes = [1, 16], strides = [1, 1]} : vector<8x16xf32> to vector<1x16xf32>
    %137 = tpu.concatenate %129, %130, %131, %132, %133, %134, %135, %136 in 1 : vector<1x16xf32>, vector<1x16xf32>, vector<1x16xf32>, vector<1x16xf32>, vector<1x16xf32>, vector<1x16xf32>, vector<1x16xf32>, vector<1x16xf32> -> vector<1x128xf32>
    %138 = tpu.concatenate %127, %137 in 0 : vector<1x128xf32>, vector<1x128xf32> -> vector<2x128xf32>
    %c0_42 = arith.constant 0 : index
    %c0_43 = arith.constant 0 : index
    %139 = vector.load %arg4[%c0_42, %c0_43] : memref<128x32xf32, #tpu.memory_space<vmem>>, vector<128x32xf32>
    %cst_44 = arith.constant dense<0.000000e+00> : vector<2x32xf32>
    %140 = tpu.matmul %138, %139, %cst_44 {dimension_numbers = #tpu.dot_dimension_numbers<[1], [0], [0], [1], [0, 0, 1, 1], [], []>} : vector<2x128xf32>, vector<128x32xf32>, vector<2x32xf32> -> vector<2x32xf32>
    %c0_45 = arith.constant 0 : index
    %c304 = arith.constant 304 : index
    %141 = vector.load %arg6[%c0_45, %c304] : memref<1x372xf32, #tpu.memory_space<vmem>>, vector<1x32xf32>
    %142 = vector.broadcast %141 : vector<1x32xf32> to vector<2x32xf32>
    %143 = arith.addf %140, %142 : vector<2x32xf32>
    %cst_46 = arith.constant 0.000000e+00 : f32
    %144 = vector.broadcast %cst_46 : f32 to vector<2x32xf32>
    %145 = arith.cmpf ogt, %143, %144 : vector<2x32xf32>
    %cst_47 = arith.constant 0.00999999977 : f32
    %146 = vector.broadcast %cst_47 : f32 to vector<2x32xf32>
    %147 = arith.mulf %146, %143 : vector<2x32xf32>
    %148 = arith.select %145, %143, %147 : vector<2x32xi1>, vector<2x32xf32>
    %cst_48 = arith.constant dense<0.000000e+00> : vector<2x32xf32>
    %149 = tpu.matmul %148, %4, %cst_48 {dimension_numbers = #tpu.dot_dimension_numbers<[1], [0], [0], [1], [0, 0, 1, 1], [], []>} : vector<2x32xf32>, vector<32x32xf32>, vector<2x32xf32> -> vector<2x32xf32>
    %c0_49 = arith.constant 0 : index
    %c336 = arith.constant 336 : index
    %150 = vector.load %arg6[%c0_49, %c336] : memref<1x372xf32, #tpu.memory_space<vmem>>, vector<1x32xf32>
    %151 = vector.broadcast %150 : vector<1x32xf32> to vector<2x32xf32>
    %152 = arith.addf %149, %151 : vector<2x32xf32>
    %cst_50 = arith.constant 0.000000e+00 : f32
    %153 = vector.broadcast %cst_50 : f32 to vector<2x32xf32>
    %154 = arith.cmpf ogt, %152, %153 : vector<2x32xf32>
    %cst_51 = arith.constant 0.00999999977 : f32
    %155 = vector.broadcast %cst_51 : f32 to vector<2x32xf32>
    %156 = arith.mulf %155, %152 : vector<2x32xf32>
    %157 = arith.select %154, %152, %156 : vector<2x32xi1>, vector<2x32xf32>
    %cst_52 = arith.constant dense<0.000000e+00> : vector<2x128xf32>
    %158 = tpu.matmul %157, %5, %cst_52 {dimension_numbers = #tpu.dot_dimension_numbers<[1], [0], [0], [1], [0, 0, 1, 1], [], []>} : vector<2x32xf32>, vector<32x128xf32>, vector<2x128xf32> -> vector<2x128xf32>
    %c0_53 = arith.constant 0 : index
    %c0_54 = arith.constant 0 : index
    %159 = vector.load %arg6[%c0_53, %c0_54] : memref<1x372xf32, #tpu.memory_space<vmem>>, vector<1x128xf32>
    %160 = vector.broadcast %159 : vector<1x128xf32> to vector<2x128xf32>
    %161 = arith.addf %158, %160 : vector<2x128xf32>
    %c0_55 = arith.constant 0 : index
    %c368 = arith.constant 368 : index
    %162 = vector.load %arg6[%c0_55, %c368] : memref<1x372xf32, #tpu.memory_space<vmem>>, vector<1x4xf32>
    %c0_56 = arith.constant 0 : index
    %c0_57 = arith.constant 0 : index
    %163 = vector.load %arg5[%c0_56, %c0_57] : memref<16x4xf32, #tpu.memory_space<vmem>>, vector<16x4xf32>
    %cst_58 = arith.constant 0.000000e+00 : f32
    %164 = vector.broadcast %cst_58 : f32 to vector<1x32xf32>
    %165 = vector.extract_strided_slice %161 {offsets = [0, 0], sizes = [1, 128], strides = [1, 1]} : vector<2x128xf32> to vector<1x128xf32>
    %166 = vector.extract_strided_slice %165 {offsets = [0, 0], sizes = [1, 16], strides = [1, 1]} : vector<1x128xf32> to vector<1x16xf32>
    %167 = vector.extract_strided_slice %165 {offsets = [0, 16], sizes = [1, 16], strides = [1, 1]} : vector<1x128xf32> to vector<1x16xf32>
    %168 = vector.extract_strided_slice %165 {offsets = [0, 32], sizes = [1, 16], strides = [1, 1]} : vector<1x128xf32> to vector<1x16xf32>
    %169 = vector.extract_strided_slice %165 {offsets = [0, 48], sizes = [1, 16], strides = [1, 1]} : vector<1x128xf32> to vector<1x16xf32>
    %170 = vector.extract_strided_slice %165 {offsets = [0, 64], sizes = [1, 16], strides = [1, 1]} : vector<1x128xf32> to vector<1x16xf32>
    %171 = vector.extract_strided_slice %165 {offsets = [0, 80], sizes = [1, 16], strides = [1, 1]} : vector<1x128xf32> to vector<1x16xf32>
    %172 = vector.extract_strided_slice %165 {offsets = [0, 96], sizes = [1, 16], strides = [1, 1]} : vector<1x128xf32> to vector<1x16xf32>
    %173 = vector.extract_strided_slice %165 {offsets = [0, 112], sizes = [1, 16], strides = [1, 1]} : vector<1x128xf32> to vector<1x16xf32>
    %174 = tpu.concatenate %166, %167, %168, %169, %170, %171, %172, %173 in 0 : vector<1x16xf32>, vector<1x16xf32>, vector<1x16xf32>, vector<1x16xf32>, vector<1x16xf32>, vector<1x16xf32>, vector<1x16xf32>, vector<1x16xf32> -> vector<8x16xf32>
    %cst_59 = arith.constant dense<0.000000e+00> : vector<8x4xf32>
    %175 = tpu.matmul %174, %163, %cst_59 {dimension_numbers = #tpu.dot_dimension_numbers<[1], [0], [0], [1], [0, 0, 1, 1], [], []>} : vector<8x16xf32>, vector<16x4xf32>, vector<8x4xf32> -> vector<8x4xf32>
    %cst_60 = arith.constant 0.000000e+00 : f32
    %176 = vector.broadcast %cst_60 : f32 to vector<8x4xf32>
    %177 = arith.maximumf %175, %176 : vector<8x4xf32>
    %178 = vector.broadcast %162 : vector<1x4xf32> to vector<8x4xf32>
    %179 = arith.mulf %177, %178 : vector<8x4xf32>
    %cst_61 = arith.constant dense<0xFF800000> : vector<8xf32>
    %180 = vector.multi_reduction <maximumf>, %179, %cst_61 [1] : vector<8x4xf32> to vector<8xf32>
    %181 = vector.shape_cast %180 : vector<8xf32> to vector<8x1xf32>
    %182 = vector.broadcast %181 : vector<8x1xf32> to vector<8x4xf32>
    %183 = arith.subf %179, %182 : vector<8x4xf32>
    %184 = math.exp %183 : vector<8x4xf32>
    %cst_62 = arith.constant dense<0.000000e+00> : vector<8xf32>
    %185 = vector.multi_reduction <add>, %184, %cst_62 [1] : vector<8x4xf32> to vector<8xf32>
    %186 = vector.shape_cast %185 : vector<8xf32> to vector<8x1xf32>
    %187 = tpu.reciprocal %186 {approx = true} : vector<8x1xf32> -> vector<8x1xf32>
    %188 = vector.broadcast %187 : vector<8x1xf32> to vector<8x4xf32>
    %189 = arith.mulf %184, %188 : vector<8x4xf32>
    %190 = vector.extract_strided_slice %189 {offsets = [0, 0], sizes = [8, 1], strides = [1, 1]} : vector<8x4xf32> to vector<8x1xf32>
    %191 = vector.broadcast %190 : vector<8x1xf32> to vector<8x16xf32>
    %192 = arith.mulf %191, %174 : vector<8x16xf32>
    %cst_63 = arith.constant dense<0.000000e+00> : vector<16xf32>
    %193 = vector.multi_reduction <add>, %192, %cst_63 [0] : vector<8x16xf32> to vector<16xf32>
    %194 = vector.shape_cast %193 : vector<16xf32> to vector<1x16xf32>
    %195 = vector.extract_strided_slice %189 {offsets = [0, 1], sizes = [8, 1], strides = [1, 1]} : vector<8x4xf32> to vector<8x1xf32>
    %196 = vector.broadcast %195 : vector<8x1xf32> to vector<8x16xf32>
    %197 = arith.mulf %196, %174 : vector<8x16xf32>
    %cst_64 = arith.constant dense<0.000000e+00> : vector<16xf32>
    %198 = vector.multi_reduction <add>, %197, %cst_64 [0] : vector<8x16xf32> to vector<16xf32>
    %199 = vector.shape_cast %198 : vector<16xf32> to vector<1x16xf32>
    %200 = vector.extract_strided_slice %189 {offsets = [0, 2], sizes = [8, 1], strides = [1, 1]} : vector<8x4xf32> to vector<8x1xf32>
    %201 = vector.broadcast %200 : vector<8x1xf32> to vector<8x16xf32>
    %202 = arith.mulf %201, %174 : vector<8x16xf32>
    %cst_65 = arith.constant dense<0.000000e+00> : vector<16xf32>
    %203 = vector.multi_reduction <add>, %202, %cst_65 [0] : vector<8x16xf32> to vector<16xf32>
    %204 = vector.shape_cast %203 : vector<16xf32> to vector<1x16xf32>
    %205 = vector.extract_strided_slice %189 {offsets = [0, 3], sizes = [8, 1], strides = [1, 1]} : vector<8x4xf32> to vector<8x1xf32>
    %206 = vector.broadcast %205 : vector<8x1xf32> to vector<8x16xf32>
    %207 = arith.mulf %206, %174 : vector<8x16xf32>
    %cst_66 = arith.constant dense<0.000000e+00> : vector<16xf32>
    %208 = vector.multi_reduction <add>, %207, %cst_66 [0] : vector<8x16xf32> to vector<16xf32>
    %209 = vector.shape_cast %208 : vector<16xf32> to vector<1x16xf32>
    %210 = tpu.concatenate %194, %199, %204, %209 in 1 : vector<1x16xf32>, vector<1x16xf32>, vector<1x16xf32>, vector<1x16xf32> -> vector<1x64xf32>
    %211 = vector.extract_strided_slice %189 {offsets = [0, 0], sizes = [1, 4], strides = [1, 1]} : vector<8x4xf32> to vector<1x4xf32>
    %212 = vector.extract_strided_slice %189 {offsets = [1, 0], sizes = [1, 4], strides = [1, 1]} : vector<8x4xf32> to vector<1x4xf32>
    %213 = vector.extract_strided_slice %189 {offsets = [2, 0], sizes = [1, 4], strides = [1, 1]} : vector<8x4xf32> to vector<1x4xf32>
    %214 = vector.extract_strided_slice %189 {offsets = [3, 0], sizes = [1, 4], strides = [1, 1]} : vector<8x4xf32> to vector<1x4xf32>
    %215 = vector.extract_strided_slice %189 {offsets = [4, 0], sizes = [1, 4], strides = [1, 1]} : vector<8x4xf32> to vector<1x4xf32>
    %216 = vector.extract_strided_slice %189 {offsets = [5, 0], sizes = [1, 4], strides = [1, 1]} : vector<8x4xf32> to vector<1x4xf32>
    %217 = vector.extract_strided_slice %189 {offsets = [6, 0], sizes = [1, 4], strides = [1, 1]} : vector<8x4xf32> to vector<1x4xf32>
    %218 = vector.extract_strided_slice %189 {offsets = [7, 0], sizes = [1, 4], strides = [1, 1]} : vector<8x4xf32> to vector<1x4xf32>
    %219 = tpu.concatenate %211, %212, %213, %214, %215, %216, %217, %218 in 1 : vector<1x4xf32>, vector<1x4xf32>, vector<1x4xf32>, vector<1x4xf32>, vector<1x4xf32>, vector<1x4xf32>, vector<1x4xf32>, vector<1x4xf32> -> vector<1x32xf32>
    %220 = tpu.concatenate %210, %219, %164 in 1 : vector<1x64xf32>, vector<1x32xf32>, vector<1x32xf32> -> vector<1x128xf32>
    %221 = vector.extract_strided_slice %161 {offsets = [1, 0], sizes = [1, 128], strides = [1, 1]} : vector<2x128xf32> to vector<1x128xf32>
    %222 = vector.extract_strided_slice %221 {offsets = [0, 0], sizes = [1, 16], strides = [1, 1]} : vector<1x128xf32> to vector<1x16xf32>
    %223 = vector.extract_strided_slice %221 {offsets = [0, 16], sizes = [1, 16], strides = [1, 1]} : vector<1x128xf32> to vector<1x16xf32>
    %224 = vector.extract_strided_slice %221 {offsets = [0, 32], sizes = [1, 16], strides = [1, 1]} : vector<1x128xf32> to vector<1x16xf32>
    %225 = vector.extract_strided_slice %221 {offsets = [0, 48], sizes = [1, 16], strides = [1, 1]} : vector<1x128xf32> to vector<1x16xf32>
    %226 = vector.extract_strided_slice %221 {offsets = [0, 64], sizes = [1, 16], strides = [1, 1]} : vector<1x128xf32> to vector<1x16xf32>
    %227 = vector.extract_strided_slice %221 {offsets = [0, 80], sizes = [1, 16], strides = [1, 1]} : vector<1x128xf32> to vector<1x16xf32>
    %228 = vector.extract_strided_slice %221 {offsets = [0, 96], sizes = [1, 16], strides = [1, 1]} : vector<1x128xf32> to vector<1x16xf32>
    %229 = vector.extract_strided_slice %221 {offsets = [0, 112], sizes = [1, 16], strides = [1, 1]} : vector<1x128xf32> to vector<1x16xf32>
    %230 = tpu.concatenate %222, %223, %224, %225, %226, %227, %228, %229 in 0 : vector<1x16xf32>, vector<1x16xf32>, vector<1x16xf32>, vector<1x16xf32>, vector<1x16xf32>, vector<1x16xf32>, vector<1x16xf32>, vector<1x16xf32> -> vector<8x16xf32>
    %cst_67 = arith.constant dense<0.000000e+00> : vector<8x4xf32>
    %231 = tpu.matmul %230, %163, %cst_67 {dimension_numbers = #tpu.dot_dimension_numbers<[1], [0], [0], [1], [0, 0, 1, 1], [], []>} : vector<8x16xf32>, vector<16x4xf32>, vector<8x4xf32> -> vector<8x4xf32>
    %cst_68 = arith.constant 0.000000e+00 : f32
    %232 = vector.broadcast %cst_68 : f32 to vector<8x4xf32>
    %233 = arith.maximumf %231, %232 : vector<8x4xf32>
    %234 = vector.broadcast %162 : vector<1x4xf32> to vector<8x4xf32>
    %235 = arith.mulf %233, %234 : vector<8x4xf32>
    %cst_69 = arith.constant dense<0xFF800000> : vector<8xf32>
    %236 = vector.multi_reduction <maximumf>, %235, %cst_69 [1] : vector<8x4xf32> to vector<8xf32>
    %237 = vector.shape_cast %236 : vector<8xf32> to vector<8x1xf32>
    %238 = vector.broadcast %237 : vector<8x1xf32> to vector<8x4xf32>
    %239 = arith.subf %235, %238 : vector<8x4xf32>
    %240 = math.exp %239 : vector<8x4xf32>
    %cst_70 = arith.constant dense<0.000000e+00> : vector<8xf32>
    %241 = vector.multi_reduction <add>, %240, %cst_70 [1] : vector<8x4xf32> to vector<8xf32>
    %242 = vector.shape_cast %241 : vector<8xf32> to vector<8x1xf32>
    %243 = tpu.reciprocal %242 {approx = true} : vector<8x1xf32> -> vector<8x1xf32>
    %244 = vector.broadcast %243 : vector<8x1xf32> to vector<8x4xf32>
    %245 = arith.mulf %240, %244 : vector<8x4xf32>
    %246 = vector.extract_strided_slice %245 {offsets = [0, 0], sizes = [8, 1], strides = [1, 1]} : vector<8x4xf32> to vector<8x1xf32>
    %247 = vector.broadcast %246 : vector<8x1xf32> to vector<8x16xf32>
    %248 = arith.mulf %247, %230 : vector<8x16xf32>
    %cst_71 = arith.constant dense<0.000000e+00> : vector<16xf32>
    %249 = vector.multi_reduction <add>, %248, %cst_71 [0] : vector<8x16xf32> to vector<16xf32>
    %250 = vector.shape_cast %249 : vector<16xf32> to vector<1x16xf32>
    %251 = vector.extract_strided_slice %245 {offsets = [0, 1], sizes = [8, 1], strides = [1, 1]} : vector<8x4xf32> to vector<8x1xf32>
    %252 = vector.broadcast %251 : vector<8x1xf32> to vector<8x16xf32>
    %253 = arith.mulf %252, %230 : vector<8x16xf32>
    %cst_72 = arith.constant dense<0.000000e+00> : vector<16xf32>
    %254 = vector.multi_reduction <add>, %253, %cst_72 [0] : vector<8x16xf32> to vector<16xf32>
    %255 = vector.shape_cast %254 : vector<16xf32> to vector<1x16xf32>
    %256 = vector.extract_strided_slice %245 {offsets = [0, 2], sizes = [8, 1], strides = [1, 1]} : vector<8x4xf32> to vector<8x1xf32>
    %257 = vector.broadcast %256 : vector<8x1xf32> to vector<8x16xf32>
    %258 = arith.mulf %257, %230 : vector<8x16xf32>
    %cst_73 = arith.constant dense<0.000000e+00> : vector<16xf32>
    %259 = vector.multi_reduction <add>, %258, %cst_73 [0] : vector<8x16xf32> to vector<16xf32>
    %260 = vector.shape_cast %259 : vector<16xf32> to vector<1x16xf32>
    %261 = vector.extract_strided_slice %245 {offsets = [0, 3], sizes = [8, 1], strides = [1, 1]} : vector<8x4xf32> to vector<8x1xf32>
    %262 = vector.broadcast %261 : vector<8x1xf32> to vector<8x16xf32>
    %263 = arith.mulf %262, %230 : vector<8x16xf32>
    %cst_74 = arith.constant dense<0.000000e+00> : vector<16xf32>
    %264 = vector.multi_reduction <add>, %263, %cst_74 [0] : vector<8x16xf32> to vector<16xf32>
    %265 = vector.shape_cast %264 : vector<16xf32> to vector<1x16xf32>
    %266 = tpu.concatenate %250, %255, %260, %265 in 1 : vector<1x16xf32>, vector<1x16xf32>, vector<1x16xf32>, vector<1x16xf32> -> vector<1x64xf32>
    %267 = vector.extract_strided_slice %245 {offsets = [0, 0], sizes = [1, 4], strides = [1, 1]} : vector<8x4xf32> to vector<1x4xf32>
    %268 = vector.extract_strided_slice %245 {offsets = [1, 0], sizes = [1, 4], strides = [1, 1]} : vector<8x4xf32> to vector<1x4xf32>
    %269 = vector.extract_strided_slice %245 {offsets = [2, 0], sizes = [1, 4], strides = [1, 1]} : vector<8x4xf32> to vector<1x4xf32>
    %270 = vector.extract_strided_slice %245 {offsets = [3, 0], sizes = [1, 4], strides = [1, 1]} : vector<8x4xf32> to vector<1x4xf32>
    %271 = vector.extract_strided_slice %245 {offsets = [4, 0], sizes = [1, 4], strides = [1, 1]} : vector<8x4xf32> to vector<1x4xf32>
    %272 = vector.extract_strided_slice %245 {offsets = [5, 0], sizes = [1, 4], strides = [1, 1]} : vector<8x4xf32> to vector<1x4xf32>
    %273 = vector.extract_strided_slice %245 {offsets = [6, 0], sizes = [1, 4], strides = [1, 1]} : vector<8x4xf32> to vector<1x4xf32>
    %274 = vector.extract_strided_slice %245 {offsets = [7, 0], sizes = [1, 4], strides = [1, 1]} : vector<8x4xf32> to vector<1x4xf32>
    %275 = tpu.concatenate %267, %268, %269, %270, %271, %272, %273, %274 in 1 : vector<1x4xf32>, vector<1x4xf32>, vector<1x4xf32>, vector<1x4xf32>, vector<1x4xf32>, vector<1x4xf32>, vector<1x4xf32>, vector<1x4xf32> -> vector<1x32xf32>
    %276 = tpu.concatenate %266, %275, %164 in 1 : vector<1x64xf32>, vector<1x32xf32>, vector<1x32xf32> -> vector<1x128xf32>
    %277 = tpu.concatenate %220, %276 in 0 : vector<1x128xf32>, vector<1x128xf32> -> vector<2x128xf32>
    %c0_75 = arith.constant 0 : index
    %c0_76 = arith.constant 0 : index
    %278 = vector.load %arg7[%c0_75, %c0_76] : memref<2x128xf32, #tpu.memory_space<vmem>>, vector<2x128xf32>
    tpu.vector_store %arg7[%c0_75, %c0_76], %277 {strides = array<i32>} : memref<2x128xf32, #tpu.memory_space<vmem>>, vector<2x128xf32>,
    return
  }
  func.func @transform_0(%arg0: i32) -> (i32, i32) {
    %c0_i32 = arith.constant 0 : i32
    %c0_i32_0 = arith.constant 0 : i32
    %c0_i32_1 = arith.constant 0 : i32
    return %c0_i32, %c0_i32_0 : i32, i32
  }
  func.func @transform_1(%arg0: i32) -> (i32, i32) {
    %c0_i32 = arith.constant 0 : i32
    %c0_i32_0 = arith.constant 0 : i32
    %c0_i32_1 = arith.constant 0 : i32
    return %c0_i32, %c0_i32_0 : i32, i32
  }
  func.func @transform_2(%arg0: i32) -> (i32, i32) {
    %c0_i32 = arith.constant 0 : i32
    %c0_i32_0 = arith.constant 0 : i32
    %c0_i32_1 = arith.constant 0 : i32
    return %c0_i32, %c0_i32_0 : i32, i32
  }
  func.func @transform_3(%arg0: i32) -> (i32, i32) {
    %c0_i32 = arith.constant 0 : i32
    %c0_i32_0 = arith.constant 0 : i32
    %c0_i32_1 = arith.constant 0 : i32
    return %c0_i32, %c0_i32_0 : i32, i32
  }
  func.func @transform_4(%arg0: i32) -> (i32, i32) {
    %c0_i32 = arith.constant 0 : i32
    %c0_i32_0 = arith.constant 0 : i32
    %c0_i32_1 = arith.constant 0 : i32
    return %c0_i32, %c0_i32_0 : i32, i32
  }
  func.func @transform_5(%arg0: i32) -> (i32, i32) {
    %c0_i32 = arith.constant 0 : i32
    %c0_i32_0 = arith.constant 0 : i32
    %c0_i32_1 = arith.constant 0 : i32
    return %c0_i32, %c0_i32_0 : i32, i32
  }
  func.func @transform_6(%arg0: i32) -> (i32, i32) {
    %c0_i32 = arith.constant 0 : i32
    %c0_i32_0 = arith.constant 0 : i32
    %c0_i32_1 = arith.constant 0 : i32
    return %c0_i32, %c0_i32_0 : i32, i32
  }
}

</mosaic_0001>

<llo_original>
// kernel: trans_pooling_encoder.1
$region0: #{trans_pooling_encoder.1}
  #allocation0 [shape = 'u32[]', space=smem, size = 0x4, offset = 0x4, fixed_abs, tag = 'smem constant byte address 0x4 - core index']
  #allocation1 [shape = 'u32[144,128]{1,0:T(1,128)}', space=vmem, size = 0x12000, scoped, tag = 'internal scratch']
  %s0 = inlined_call_operand.vmem [shape: f32[16,16], index: 0, kind: input, shape index: {}]
  %s1 = inlined_call_operand.vmem [shape: f32[16,96], index: 1, kind: input, shape index: {}]
  %s2 = inlined_call_operand.vmem [shape: f32[32,176], index: 2, kind: input, shape index: {}]
  %s3 = inlined_call_operand.vmem [shape: f32[128,32], index: 3, kind: input, shape index: {}]
  %s4 = inlined_call_operand.vmem [shape: f32[16,4], index: 4, kind: input, shape index: {}]
  %s5 = inlined_call_operand.vmem [shape: f32[1,372], index: 5, kind: input, shape index: {}]
  %s6 = inlined_call_operand.vmem [shape: f32[2,128], index: 6, kind: output, shape index: {}]
  %s7 = sld [smem:[#allocation0]]
  $region34: #{trans_pooling_encoder.1} parent=0
    _
  %s9 = ssub.s32 1, %s7
  %s10 = scalar_select 0, %s9, %s7
  // Predicated region
  $region2: #{trans_pooling_encoder.1} parent=0 // pred_check
    _
  $region3: #{trans_pooling_encoder.1} parent=0 // pred_check_branch
    %12 = sbr.rel (0) target = $region5
  $region4: #{trans_pooling_encoder.1} parent=0 // pred_region
    _
  $region5: #{trans_pooling_encoder.1} parent=0 // pred_fallthru
    _
  // Predicated region
  $region6: #{trans_pooling_encoder.1} parent=0 // pred_check
    _
  $region7: #{trans_pooling_encoder.1} parent=0 // pred_check_branch
    %14 = sbr.rel (0) target = $region9
  $region8: #{trans_pooling_encoder.1} parent=0 // pred_region
    _
  $region9: #{trans_pooling_encoder.1} parent=0 // pred_fallthru
    _
  // Predicated region
  $region10: #{trans_pooling_encoder.1} parent=0 // pred_check
    _
  $region11: #{trans_pooling_encoder.1} parent=0 // pred_check_branch
    %16 = sbr.rel (0) target = $region13
  $region12: #{trans_pooling_encoder.1} parent=0 // pred_region
    _
  $region13: #{trans_pooling_encoder.1} parent=0 // pred_fallthru
    _
  // Predicated region
  $region14: #{trans_pooling_encoder.1} parent=0 // pred_check
    _
  $region15: #{trans_pooling_encoder.1} parent=0 // pred_check_branch
    %18 = sbr.rel (0) target = $region17
  $region16: #{trans_pooling_encoder.1} parent=0 // pred_region
    _
  $region17: #{trans_pooling_encoder.1} parent=0 // pred_fallthru
    _
  // Predicated region
  $region18: #{trans_pooling_encoder.1} parent=0 // pred_check
    _
  $region19: #{trans_pooling_encoder.1} parent=0 // pred_check_branch
    %20 = sbr.rel (0) target = $region21
  $region20: #{trans_pooling_encoder.1} parent=0 // pred_region
    _
  $region21: #{trans_pooling_encoder.1} parent=0 // pred_fallthru
    _
  // Predicated region
  $region22: #{trans_pooling_encoder.1} parent=0 // pred_check
    _
  $region23: #{trans_pooling_encoder.1} parent=0 // pred_check_branch
    %22 = sbr.rel (0) target = $region25
  $region24: #{trans_pooling_encoder.1} parent=0 // pred_region
    _
  $region25: #{trans_pooling_encoder.1} parent=0 // pred_fallthru
    _
  %v23 = vld [vmem:[%s1] sm:$0xff]
  %v24 = vld [vmem:[%s1 + $0x8] sm:$0xff]
  %v25 = vld [vmem:[%s2] sm:$0xff]
  %v26 = vld [vmem:[%s2 + $0x10] sm:$0xff]
  %v27 = vld [vmem:[%s2 + $0x20] sm:$0xff]
  %v28 = vld [vmem:[%s2 + $0x30] sm:$0xff]
  %v29 = vld [vmem:[%s2 + $0x8] sm:$0xff]
  %v30 = vld [vmem:[%s2 + $0x18] sm:$0xff]
  %v31 = vld [vmem:[%s2 + $0x28] sm:$0xff]
  %v32 = vld [vmem:[%s2 + $0x38] sm:$0xff]
  %v33 = vld [vmem:[%s0] sm:$0xff]
  %v34 = vld [vmem:[%s0 + $0x8] sm:$0xff]
  %v35 = vld [vmem:[%s5 + $0x1] sm:$0x1]
  %v37 = vlaneseq
  %v38 = vshrl.u32 %v37, 7
  %v39 = vsub.s32 0, %v38
  %v40 = vrot.slane %v35, %v39
  %vm42 = vcmask 130048
  %v44 = vsel %vm42, %v33, 0
  %v47 = vsel %vm42, %v34, 0
  %49 = vmatprep.subr.mxu0 0.0
  %50 = vmatpush1.msra.mxu0 %v23
  %51 = vmatprep.subr.mxu0 0.0
  %52 = vmatpush1.msra.mxu0 %v24
  %53 = vmatprep.subr.mxu0 0.0
  %54 = vmatpush1.msra.mxu0 0.0
  %55 = vmatprep.subr.mxu0 0.0
  %56 = vmatpush1.msra.mxu0 0.0
  %57 = vmatprep.subr.mxu0 0.0
  %58 = vmatpush1.msra.mxu0 0.0
  %59 = vmatprep.subr.mxu0 0.0
  %60 = vmatpush1.msra.mxu0 0.0
  %61 = vmatprep.subr.mxu0 0.0
  %62 = vmatpush1.msra.mxu0 0.0
  %63 = vmatprep.subr.mxu0 0.0
  %64 = vmatpush1.msra.mxu0 0.0
  %65 = vmatprep.subr.mxu0 0.0
  %66 = vmatpush1.msra.mxu0 0.0
  %67 = vmatprep.subr.mxu0 0.0
  %68 = vmatpush1.msra.mxu0 0.0
  %69 = vmatprep.subr.mxu0 0.0
  %70 = vmatpush1.msra.mxu0 0.0
  %71 = vmatprep.subr.mxu0 0.0
  %72 = vmatpush1.msra.mxu0 0.0
  %73 = vmatprep.subr.mxu0 0.0
  %74 = vmatpush1.msra.mxu0 0.0
  %75 = vmatprep.subr.mxu0 0.0
  %76 = vmatpush1.msra.mxu0 0.0
  %77 = vmatprep.subr.mxu0 0.0
  %78 = vmatpush1.msra.mxu0 0.0
  %79 = vmatprep.subr.mxu0 0.0
  %80 = vmatpush1.msra.mxu0 0.0
  %81 = vmatprep.subr.mxu0 0.0
  %82 = vmatpush1.msra.mxu0 0.0
  %83 = vmatprep.subr.mxu0 0.0
  %84 = vmatpush1.msra.mxu0 0.0
  %85 = vmatprep.subr.mxu0 0.0
  %86 = vmatpush1.msra.mxu0 0.0
  %87 = vmatprep.subr.mxu0 0.0
  %88 = vmatpush1.msra.mxu0 0.0
  %89 = vmatprep.subr.mxu0 0.0
  %90 = vmatpush1.msra.mxu0 0.0
  %91 = vmatprep.subr.mxu0 0.0
  %92 = vmatpush1.msra.mxu0 0.0
  %93 = vmatprep.subr.mxu0 0.0
  %94 = vmatpush1.msra.mxu0 0.0
  %95 = vmatprep.subr.mxu0 0.0
  %96 = vmatpush1.msra.mxu0 0.0
  %97 = vmatprep.subr.mxu0 0.0
  %98 = vmatpush1.msra.mxu0 0.0
  %99 = vmatprep.subr.mxu0 0.0
  %100 = vmatpush1.msra.mxu0 0.0
  %101 = vmatprep.subr.mxu0 0.0
  %102 = vmatpush1.msra.mxu0 0.0
  %103 = vmatprep.subr.mxu0 0.0
  %104 = vmatpush1.msra.mxu0 0.0
  %105 = vmatprep.subr.mxu0 0.0
  %106 = vmatpush1.msra.mxu0 0.0
  %107 = vmatprep.subr.mxu0 0.0
  %108 = vmatpush1.msra.mxu0 0.0
  %109 = vmatprep.subr.mxu0 0.0
  %110 = vmatpush1.msra.mxu0 0.0
  %111 = vmatprep.subr.mxu0 0.0
  %112 = vmatpush1.msra.mxu0 0.0
  %113 = vmatprep.mubr.f32.mxu0 0.0
  %114 = vmatmul.mubr.f32.gmra.mrb[0].mxu0 %v44
  %v115 = vpop.f32.mrb[0].mxu0
  %v116 = vadd.f32 %v40, %v115
  %v117 = vpop.f32.mrb[0].mxu0
  %118 = vmatprep.mubr.f32.mxu0 0.0
  %119 = vmatmul.mubr.f32.gmra.mrb[0].mxu0 %v47
  %v120 = vpop.f32.mrb[0].mxu0
  %v121 = vadd.f32 %v40, %v120
  %v122 = vpop.f32.mrb[0].mxu0
  %123 = vdwg.mxu0
  %125 = vrot.lane.b32.xlu0 %v116, 112
  %v126 = vpop.permute.xlu0 %125
  %vm127 = vcmask 64512
  %v128 = vsel %vm127, %v116, 0
  %v130 = vsel %vm127, %v126, 0
  %132 = vmatprep.subr.mxu0 0.0
  %133 = vmatpush1.xpose.msra.mxu0 %v130
  %134 = vmatprep.subr.mxu0 0.0
  %135 = vmatpush1.xpose.msra.mxu0 0.0
  %136 = vmatprep.subr.mxu0 0.0
  %137 = vmatpush1.xpose.msra.mxu0 0.0
  %138 = vmatprep.subr.mxu0 0.0
  %139 = vmatpush1.xpose.msra.mxu0 0.0
  %140 = vmatprep.subr.mxu0 0.0
  %141 = vmatpush1.xpose.msra.mxu0 0.0
  %142 = vmatprep.subr.mxu0 0.0
  %143 = vmatpush1.xpose.msra.mxu0 0.0
  %144 = vmatprep.subr.mxu0 0.0
  %145 = vmatpush1.xpose.msra.mxu0 0.0
  %146 = vmatprep.subr.mxu0 0.0
  %147 = vmatpush1.xpose.msra.mxu0 0.0
  %148 = vmatprep.subr.mxu0 0.0
  %149 = vmatpush1.xpose.msra.mxu0 0.0
  %150 = vmatprep.subr.mxu0 0.0
  %151 = vmatpush1.xpose.msra.mxu0 0.0
  %152 = vmatprep.subr.mxu0 0.0
  %153 = vmatpush1.xpose.msra.mxu0 0.0
  %154 = vmatprep.subr.mxu0 0.0
  %155 = vmatpush1.xpose.msra.mxu0 0.0
  %156 = vmatprep.subr.mxu0 0.0
  %157 = vmatpush1.xpose.msra.mxu0 0.0
  %158 = vmatprep.subr.mxu0 0.0
  %159 = vmatpush1.xpose.msra.mxu0 0.0
  %160 = vmatprep.subr.mxu0 0.0
  %161 = vmatpush1.xpose.msra.mxu0 0.0
  %162 = vmatprep.subr.mxu0 0.0
  %163 = vmatpush1.xpose.msra.mxu0 0.0
  %164 = vmatprep.subr.mxu0 0.0
  %165 = vmatpush1.xpose.msra.mxu0 0.0
  %166 = vmatprep.subr.mxu0 0.0
  %167 = vmatpush1.xpose.msra.mxu0 0.0
  %168 = vmatprep.subr.mxu0 0.0
  %169 = vmatpush1.xpose.msra.mxu0 0.0
  %170 = vmatprep.subr.mxu0 0.0
  %171 = vmatpush1.xpose.msra.mxu0 0.0
  %172 = vmatprep.subr.mxu0 0.0
  %173 = vmatpush1.xpose.msra.mxu0 0.0
  %174 = vmatprep.subr.mxu0 0.0
  %175 = vmatpush1.xpose.msra.mxu0 0.0
  %176 = vmatprep.subr.mxu0 0.0
  %177 = vmatpush1.xpose.msra.mxu0 0.0
  %178 = vmatprep.subr.mxu0 0.0
  %179 = vmatpush1.xpose.msra.mxu0 0.0
  %180 = vmatprep.subr.mxu0 0.0
  %181 = vmatpush1.xpose.msra.mxu0 0.0
  %182 = vmatprep.subr.mxu0 0.0
  %183 = vmatpush1.xpose.msra.mxu0 0.0
  %184 = vmatprep.subr.mxu0 0.0
  %185 = vmatpush1.xpose.msra.mxu0 0.0
  %186 = vmatprep.subr.mxu0 0.0
  %187 = vmatpush1.xpose.msra.mxu0 0.0
  %188 = vmatprep.subr.mxu0 0.0
  %189 = vmatpush1.xpose.msra.mxu0 0.0
  %190 = vmatprep.subr.mxu0 0.0
  %191 = vmatpush1.xpose.msra.mxu0 0.0
  %192 = vmatprep.subr.mxu0 0.0
  %193 = vmatpush1.xpose.msra.mxu0 0.0
  %194 = vmatprep.subr.mxu0 0.0
  %195 = vmatpush1.xpose.msra.mxu0 0.0
  %196 = vmatprep.mubr.f32.mxu0 0.0
  %197 = vmatmul.mubr.f32.gmra.mrb[0].mxu0 %v128
  %v198 = vpop.f32.mrb[0].mxu0
  %v199 = vadd.f32 0.0, %v198
  %v200 = vpop.f32.mrb[0].mxu0
  %201 = vdwg.mxu0
  %203 = vrot.lane.b32.xlu0 %v121, 112
  %v204 = vpop.permute.xlu0 %203
  %v205 = vsel %vm127, %v121, 0
  %v207 = vsel %vm127, %v204, 0
  %209 = vmatprep.subr.mxu0 0.0
  %210 = vmatpush1.xpose.msra.mxu0 %v207
  %211 = vmatprep.subr.mxu0 0.0
  %212 = vmatpush1.xpose.msra.mxu0 0.0
  %213 = vmatprep.subr.mxu0 0.0
  %214 = vmatpush1.xpose.msra.mxu0 0.0
  %215 = vmatprep.subr.mxu0 0.0
  %216 = vmatpush1.xpose.msra.mxu0 0.0
  %217 = vmatprep.subr.mxu0 0.0
  %218 = vmatpush1.xpose.msra.mxu0 0.0
  %219 = vmatprep.subr.mxu0 0.0
  %220 = vmatpush1.xpose.msra.mxu0 0.0
  %221 = vmatprep.subr.mxu0 0.0
  %222 = vmatpush1.xpose.msra.mxu0 0.0
  %223 = vmatprep.subr.mxu0 0.0
  %224 = vmatpush1.xpose.msra.mxu0 0.0
  %225 = vmatprep.subr.mxu0 0.0
  %226 = vmatpush1.xpose.msra.mxu0 0.0
  %227 = vmatprep.subr.mxu0 0.0
  %228 = vmatpush1.xpose.msra.mxu0 0.0
  %229 = vmatprep.subr.mxu0 0.0
  %230 = vmatpush1.xpose.msra.mxu0 0.0
  %231 = vmatprep.subr.mxu0 0.0
  %232 = vmatpush1.xpose.msra.mxu0 0.0
  %233 = vmatprep.subr.mxu0 0.0
  %234 = vmatpush1.xpose.msra.mxu0 0.0
  %235 = vmatprep.subr.mxu0 0.0
  %236 = vmatpush1.xpose.msra.mxu0 0.0
  %237 = vmatprep.subr.mxu0 0.0
  %238 = vmatpush1.xpose.msra.mxu0 0.0
  %239 = vmatprep.subr.mxu0 0.0
  %240 = vmatpush1.xpose.msra.mxu0 0.0
  %241 = vmatprep.subr.mxu0 0.0
  %242 = vmatpush1.xpose.msra.mxu0 0.0
  %243 = vmatprep.subr.mxu0 0.0
  %244 = vmatpush1.xpose.msra.mxu0 0.0
  %245 = vmatprep.subr.mxu0 0.0
  %246 = vmatpush1.xpose.msra.mxu0 0.0
  %247 = vmatprep.subr.mxu0 0.0
  %248 = vmatpush1.xpose.msra.mxu0 0.0
  %249 = vmatprep.subr.mxu0 0.0
  %250 = vmatpush1.xpose.msra.mxu0 0.0
  %251 = vmatprep.subr.mxu0 0.0
  %252 = vmatpush1.xpose.msra.mxu0 0.0
  %253 = vmatprep.subr.mxu0 0.0
  %254 = vmatpush1.xpose.msra.mxu0 0.0
  %255 = vmatprep.subr.mxu0 0.0
  %256 = vmatpush1.xpose.msra.mxu0 0.0
  %257 = vmatprep.subr.mxu0 0.0
  %258 = vmatpush1.xpose.msra.mxu0 0.0
  %259 = vmatprep.subr.mxu0 0.0
  %260 = vmatpush1.xpose.msra.mxu0 0.0
  %261 = vmatprep.subr.mxu0 0.0
  %262 = vmatpush1.xpose.msra.mxu0 0.0
  %263 = vmatprep.subr.mxu0 0.0
  %264 = vmatpush1.xpose.msra.mxu0 0.0
  %265 = vmatprep.subr.mxu0 0.0
  %266 = vmatpush1.xpose.msra.mxu0 0.0
  %267 = vmatprep.subr.mxu0 0.0
  %268 = vmatpush1.xpose.msra.mxu0 0.0
  %269 = vmatprep.subr.mxu0 0.0
  %270 = vmatpush1.xpose.msra.mxu0 0.0
  %271 = vmatprep.subr.mxu0 0.0
  %272 = vmatpush1.xpose.msra.mxu0 0.0
  %273 = vmatprep.mubr.f32.mxu0 0.0
  %274 = vmatmul.mubr.f32.gmra.mrb[0].mxu0 %v205
  %v275 = vpop.f32.mrb[0].mxu0
  %v276 = vadd.f32 0.0, %v275
  %v277 = vpop.f32.mrb[0].mxu0
  %278 = vdwg.mxu0
  %v279 = vmul.f32 %v199, 0.35355338
  %v280 = vmul.f32 %v276, 0.35355338
  %v281 = vsel %vm127, %v279, -inf
  %282 = vmax.xlane.f32.xlu0 %v281
  %v283 = vpop.xlane.xlu0 %282
  %v284 = vsel %vm127, %v280, -inf
  %285 = vmax.xlane.f32.xlu0 %v284
  %v286 = vpop.xlane.xlu0 %285
  %v287 = vsub.f32 %v279, %v283
  %v288 = vsub.f32 %v280, %v286
  %v289 = vmul.f32 %v287, 1.442695
  %v290 = vpow.pop %v289
  %v291 = vmul.f32 %v288, 1.442695
  %v292 = vpow.pop %v291
  %v293 = vsel %vm127, %v290, 0.0
  %294 = vadd.xlane.f32.xlu0 %v293
  %v295 = vpop.xlane.xlu0 %294
  %v296 = vsel %vm127, %v292, 0.0
  %297 = vadd.xlane.f32.xlu0 %v296
  %v298 = vpop.xlane.xlu0 %297
  %v299 = vrcp.pop %v295
  %v300 = vrcp.pop %v298
  %v301 = vmul.f32 %v290, %v299
  %v302 = vmul.f32 %v292, %v300
  %303 = vrot.lane.b32.xlu0 %v116, 96
  %v304 = vpop.permute.xlu0 %303
  %v307 = vsel %vm127, %v301, 0
  %309 = vmatprep.subr.mxu0 0.0
  %310 = vmatpush1.msra.mxu0 %v304
  %311 = vmatprep.subr.mxu0 0.0
  %312 = vmatpush1.msra.mxu0 0.0
  %313 = vmatprep.subr.mxu0 0.0
  %314 = vmatpush1.msra.mxu0 0.0
  %315 = vmatprep.subr.mxu0 0.0
  %316 = vmatpush1.msra.mxu0 0.0
  %317 = vmatprep.subr.mxu0 0.0
  %318 = vmatpush1.msra.mxu0 0.0
  %319 = vmatprep.subr.mxu0 0.0
  %320 = vmatpush1.msra.mxu0 0.0
  %321 = vmatprep.subr.mxu0 0.0
  %322 = vmatpush1.msra.mxu0 0.0
  %323 = vmatprep.subr.mxu0 0.0
  %324 = vmatpush1.msra.mxu0 0.0
  %325 = vmatprep.subr.mxu0 0.0
  %326 = vmatpush1.msra.mxu0 0.0
  %327 = vmatprep.subr.mxu0 0.0
  %328 = vmatpush1.msra.mxu0 0.0
  %329 = vmatprep.subr.mxu0 0.0
  %330 = vmatpush1.msra.mxu0 0.0
  %331 = vmatprep.subr.mxu0 0.0
  %332 = vmatpush1.msra.mxu0 0.0
  %333 = vmatprep.subr.mxu0 0.0
  %334 = vmatpush1.msra.mxu0 0.0
  %335 = vmatprep.subr.mxu0 0.0
  %336 = vmatpush1.msra.mxu0 0.0
  %337 = vmatprep.subr.mxu0 0.0
  %338 = vmatpush1.msra.mxu0 0.0
  %339 = vmatprep.subr.mxu0 0.0
  %340 = vmatpush1.msra.mxu0 0.0
  %341 = vmatprep.subr.mxu0 0.0
  %342 = vmatpush1.msra.mxu0 0.0
  %343 = vmatprep.subr.mxu0 0.0
  %344 = vmatpush1.msra.mxu0 0.0
  %345 = vmatprep.subr.mxu0 0.0
  %346 = vmatpush1.msra.mxu0 0.0
  %347 = vmatprep.subr.mxu0 0.0
  %348 = vmatpush1.msra.mxu0 0.0
  %349 = vmatprep.subr.mxu0 0.0
  %350 = vmatpush1.msra.mxu0 0.0
  %351 = vmatprep.subr.mxu0 0.0
  %352 = vmatpush1.msra.mxu0 0.0
  %353 = vmatprep.subr.mxu0 0.0
  %354 = vmatpush1.msra.mxu0 0.0
  %355 = vmatprep.subr.mxu0 0.0
  %356 = vmatpush1.msra.mxu0 0.0
  %357 = vmatprep.subr.mxu0 0.0
  %358 = vmatpush1.msra.mxu0 0.0
  %359 = vmatprep.subr.mxu0 0.0
  %360 = vmatpush1.msra.mxu0 0.0
  %361 = vmatprep.subr.mxu0 0.0
  %362 = vmatpush1.msra.mxu0 0.0
  %363 = vmatprep.subr.mxu0 0.0
  %364 = vmatpush1.msra.mxu0 0.0
  %365 = vmatprep.subr.mxu0 0.0
  %366 = vmatpush1.msra.mxu0 0.0
  %367 = vmatprep.subr.mxu0 0.0
  %368 = vmatpush1.msra.mxu0 0.0
  %369 = vmatprep.subr.mxu0 0.0
  %370 = vmatpush1.msra.mxu0 0.0
  %371 = vmatprep.subr.mxu0 0.0
  %372 = vmatpush1.msra.mxu0 0.0
  %373 = vmatprep.mubr.f32.mxu0 0.0
  %374 = vmatmul.mubr.f32.gmra.mrb[0].mxu0 %v307
  %v375 = vpop.f32.mrb[0].mxu0
  %v376 = vadd.f32 0.0, %v375
  %v377 = vpop.f32.mrb[0].mxu0
  %378 = vdwg.mxu0
  %379 = vrot.lane.b32.xlu0 %v121, 96
  %v380 = vpop.permute.xlu0 %379
  %v383 = vsel %vm127, %v302, 0
  %385 = vmatprep.subr.mxu0 0.0
  %386 = vmatpush1.msra.mxu0 %v380
  %387 = vmatprep.subr.mxu0 0.0
  %388 = vmatpush1.msra.mxu0 0.0
  %389 = vmatprep.subr.mxu0 0.0
  %390 = vmatpush1.msra.mxu0 0.0
  %391 = vmatprep.subr.mxu0 0.0
  %392 = vmatpush1.msra.mxu0 0.0
  %393 = vmatprep.subr.mxu0 0.0
  %394 = vmatpush1.msra.mxu0 0.0
  %395 = vmatprep.subr.mxu0 0.0
  %396 = vmatpush1.msra.mxu0 0.0
  %397 = vmatprep.subr.mxu0 0.0
  %398 = vmatpush1.msra.mxu0 0.0
  %399 = vmatprep.subr.mxu0 0.0
  %400 = vmatpush1.msra.mxu0 0.0
  %401 = vmatprep.subr.mxu0 0.0
  %402 = vmatpush1.msra.mxu0 0.0
  %403 = vmatprep.subr.mxu0 0.0
  %404 = vmatpush1.msra.mxu0 0.0
  %405 = vmatprep.subr.mxu0 0.0
  %406 = vmatpush1.msra.mxu0 0.0
  %407 = vmatprep.subr.mxu0 0.0
  %408 = vmatpush1.msra.mxu0 0.0
  %409 = vmatprep.subr.mxu0 0.0
  %410 = vmatpush1.msra.mxu0 0.0
  %411 = vmatprep.subr.mxu0 0.0
  %412 = vmatpush1.msra.mxu0 0.0
  %413 = vmatprep.subr.mxu0 0.0
  %414 = vmatpush1.msra.mxu0 0.0
  %415 = vmatprep.subr.mxu0 0.0
  %416 = vmatpush1.msra.mxu0 0.0
  %417 = vmatprep.subr.mxu0 0.0
  %418 = vmatpush1.msra.mxu0 0.0
  %419 = vmatprep.subr.mxu0 0.0
  %420 = vmatpush1.msra.mxu0 0.0
  %421 = vmatprep.subr.mxu0 0.0
  %422 = vmatpush1.msra.mxu0 0.0
  %423 = vmatprep.subr.mxu0 0.0
  %424 = vmatpush1.msra.mxu0 0.0
  %425 = vmatprep.subr.mxu0 0.0
  %426 = vmatpush1.msra.mxu0 0.0
  %427 = vmatprep.subr.mxu0 0.0
  %428 = vmatpush1.msra.mxu0 0.0
  %429 = vmatprep.subr.mxu0 0.0
  %430 = vmatpush1.msra.mxu0 0.0
  %431 = vmatprep.subr.mxu0 0.0
  %432 = vmatpush1.msra.mxu0 0.0
  %433 = vmatprep.subr.mxu0 0.0
  %434 = vmatpush1.msra.mxu0 0.0
  %435 = vmatprep.subr.mxu0 0.0
  %436 = vmatpush1.msra.mxu0 0.0
  %437 = vmatprep.subr.mxu0 0.0
  %438 = vmatpush1.msra.mxu0 0.0
  %439 = vmatprep.subr.mxu0 0.0
  %440 = vmatpush1.msra.mxu0 0.0
  %441 = vmatprep.subr.mxu0 0.0
  %442 = vmatpush1.msra.mxu0 0.0
  %443 = vmatprep.subr.mxu0 0.0
  %444 = vmatpush1.msra.mxu0 0.0
  %445 = vmatprep.subr.mxu0 0.0
  %446 = vmatpush1.msra.mxu0 0.0
  %447 = vmatprep.subr.mxu0 0.0
  %448 = vmatpush1.msra.mxu0 0.0
  %449 = vmatprep.mubr.f32.mxu0 0.0
  %450 = vmatmul.mubr.f32.gmra.mrb[0].mxu0 %v383
  %v451 = vpop.f32.mrb[0].mxu0
  %v452 = vadd.f32 0.0, %v451
  %v453 = vpop.f32.mrb[0].mxu0
  %454 = vdwg.mxu0
  %455 = vrot.lane.b32.xlu0 %v116, 120
  %v456 = vpop.permute.xlu0 %455
  %457 = vrot.lane.b32.xlu0 %v116, 104
  %v458 = vpop.permute.xlu0 %457
  %v459 = vsel %vm127, %v456, 0
  %v461 = vsel %vm127, %v458, 0
  %463 = vmatprep.subr.mxu0 0.0
  %464 = vmatpush1.xpose.msra.mxu0 %v461
  %465 = vmatprep.subr.mxu0 0.0
  %466 = vmatpush1.xpose.msra.mxu0 0.0
  %467 = vmatprep.subr.mxu0 0.0
  %468 = vmatpush1.xpose.msra.mxu0 0.0
  %469 = vmatprep.subr.mxu0 0.0
  %470 = vmatpush1.xpose.msra.mxu0 0.0
  %471 = vmatprep.subr.mxu0 0.0
  %472 = vmatpush1.xpose.msra.mxu0 0.0
  %473 = vmatprep.subr.mxu0 0.0
  %474 = vmatpush1.xpose.msra.mxu0 0.0
  %475 = vmatprep.subr.mxu0 0.0
  %476 = vmatpush1.xpose.msra.mxu0 0.0
  %477 = vmatprep.subr.mxu0 0.0
  %478 = vmatpush1.xpose.msra.mxu0 0.0
  %479 = vmatprep.subr.mxu0 0.0
  %480 = vmatpush1.xpose.msra.mxu0 0.0
  %481 = vmatprep.subr.mxu0 0.0
  %482 = vmatpush1.xpose.msra.mxu0 0.0
  %483 = vmatprep.subr.mxu0 0.0
  %484 = vmatpush1.xpose.msra.mxu0 0.0
  %485 = vmatprep.subr.mxu0 0.0
  %486 = vmatpush1.xpose.msra.mxu0 0.0
  %487 = vmatprep.subr.mxu0 0.0
  %488 = vmatpush1.xpose.msra.mxu0 0.0
  %489 = vmatprep.subr.mxu0 0.0
  %490 = vmatpush1.xpose.msra.mxu0 0.0
  %491 = vmatprep.subr.mxu0 0.0
  %492 = vmatpush1.xpose.msra.mxu0 0.0
  %493 = vmatprep.subr.mxu0 0.0
  %494 = vmatpush1.xpose.msra.mxu0 0.0
  %495 = vmatprep.subr.mxu0 0.0
  %496 = vmatpush1.xpose.msra.mxu0 0.0
  %497 = vmatprep.subr.mxu0 0.0
  %498 = vmatpush1.xpose.msra.mxu0 0.0
  %499 = vmatprep.subr.mxu0 0.0
  %500 = vmatpush1.xpose.msra.mxu0 0.0
  %501 = vmatprep.subr.mxu0 0.0
  %502 = vmatpush1.xpose.msra.mxu0 0.0
  %503 = vmatprep.subr.mxu0 0.0
  %504 = vmatpush1.xpose.msra.mxu0 0.0
  %505 = vmatprep.subr.mxu0 0.0
  %506 = vmatpush1.xpose.msra.mxu0 0.0
  %507 = vmatprep.subr.mxu0 0.0
  %508 = vmatpush1.xpose.msra.mxu0 0.0
  %509 = vmatprep.subr.mxu0 0.0
  %510 = vmatpush1.xpose.msra.mxu0 0.0
  %511 = vmatprep.subr.mxu0 0.0
  %512 = vmatpush1.xpose.msra.mxu0 0.0
  %513 = vmatprep.subr.mxu0 0.0
  %514 = vmatpush1.xpose.msra.mxu0 0.0
  %515 = vmatprep.subr.mxu0 0.0
  %516 = vmatpush1.xpose.msra.mxu0 0.0
  %517 = vmatprep.subr.mxu0 0.0
  %518 = vmatpush1.xpose.msra.mxu0 0.0
  %519 = vmatprep.subr.mxu0 0.0
  %520 = vmatpush1.xpose.msra.mxu0 0.0
  %521 = vmatprep.subr.mxu0 0.0
  %522 = vmatpush1.xpose.msra.mxu0 0.0
  %523 = vmatprep.subr.mxu0 0.0
  %524 = vmatpush1.xpose.msra.mxu0 0.0
  %525 = vmatprep.subr.mxu0 0.0
  %526 = vmatpush1.xpose.msra.mxu0 0.0
  %527 = vmatprep.mubr.f32.mxu0 0.0
  %528 = vmatmul.mubr.f32.gmra.mrb[0].mxu0 %v459
  %v529 = vpop.f32.mrb[0].mxu0
  %v530 = vadd.f32 0.0, %v529
  %v531 = vpop.f32.mrb[0].mxu0
  %532 = vdwg.mxu0
  %533 = vrot.lane.b32.xlu0 %v121, 120
  %v534 = vpop.permute.xlu0 %533
  %535 = vrot.lane.b32.xlu0 %v121, 104
  %v536 = vpop.permute.xlu0 %535
  %v537 = vsel %vm127, %v534, 0
  %v539 = vsel %vm127, %v536, 0
  %541 = vmatprep.subr.mxu0 0.0
  %542 = vmatpush1.xpose.msra.mxu0 %v539
  %543 = vmatprep.subr.mxu0 0.0
  %544 = vmatpush1.xpose.msra.mxu0 0.0
  %545 = vmatprep.subr.mxu0 0.0
  %546 = vmatpush1.xpose.msra.mxu0 0.0
  %547 = vmatprep.subr.mxu0 0.0
  %548 = vmatpush1.xpose.msra.mxu0 0.0
  %549 = vmatprep.subr.mxu0 0.0
  %550 = vmatpush1.xpose.msra.mxu0 0.0
  %551 = vmatprep.subr.mxu0 0.0
  %552 = vmatpush1.xpose.msra.mxu0 0.0
  %553 = vmatprep.subr.mxu0 0.0
  %554 = vmatpush1.xpose.msra.mxu0 0.0
  %555 = vmatprep.subr.mxu0 0.0
  %556 = vmatpush1.xpose.msra.mxu0 0.0
  %557 = vmatprep.subr.mxu0 0.0
  %558 = vmatpush1.xpose.msra.mxu0 0.0
  %559 = vmatprep.subr.mxu0 0.0
  %560 = vmatpush1.xpose.msra.mxu0 0.0
  %561 = vmatprep.subr.mxu0 0.0
  %562 = vmatpush1.xpose.msra.mxu0 0.0
  %563 = vmatprep.subr.mxu0 0.0
  %564 = vmatpush1.xpose.msra.mxu0 0.0
  %565 = vmatprep.subr.mxu0 0.0
  %566 = vmatpush1.xpose.msra.mxu0 0.0
  %567 = vmatprep.subr.mxu0 0.0
  %568 = vmatpush1.xpose.msra.mxu0 0.0
  %569 = vmatprep.subr.mxu0 0.0
  %570 = vmatpush1.xpose.msra.mxu0 0.0
  %571 = vmatprep.subr.mxu0 0.0
  %572 = vmatpush1.xpose.msra.mxu0 0.0
  %573 = vmatprep.subr.mxu0 0.0
  %574 = vmatpush1.xpose.msra.mxu0 0.0
  %575 = vmatprep.subr.mxu0 0.0
  %576 = vmatpush1.xpose.msra.mxu0 0.0
  %577 = vmatprep.subr.mxu0 0.0
  %578 = vmatpush1.xpose.msra.mxu0 0.0
  %579 = vmatprep.subr.mxu0 0.0
  %580 = vmatpush1.xpose.msra.mxu0 0.0
  %581 = vmatprep.subr.mxu0 0.0
  %582 = vmatpush1.xpose.msra.mxu0 0.0
  %583 = vmatprep.subr.mxu0 0.0
  %584 = vmatpush1.xpose.msra.mxu0 0.0
  %585 = vmatprep.subr.mxu0 0.0
  %586 = vmatpush1.xpose.msra.mxu0 0.0
  %587 = vmatprep.subr.mxu0 0.0
  %588 = vmatpush1.xpose.msra.mxu0 0.0
  %589 = vmatprep.subr.mxu0 0.0
  %590 = vmatpush1.xpose.msra.mxu0 0.0
  %591 = vmatprep.subr.mxu0 0.0
  %592 = vmatpush1.xpose.msra.mxu0 0.0
  %593 = vmatprep.subr.mxu0 0.0
  %594 = vmatpush1.xpose.msra.mxu0 0.0
  %595 = vmatprep.subr.mxu0 0.0
  %596 = vmatpush1.xpose.msra.mxu0 0.0
  %597 = vmatprep.subr.mxu0 0.0
  %598 = vmatpush1.xpose.msra.mxu0 0.0
  %599 = vmatprep.subr.mxu0 0.0
  %600 = vmatpush1.xpose.msra.mxu0 0.0
  %601 = vmatprep.subr.mxu0 0.0
  %602 = vmatpush1.xpose.msra.mxu0 0.0
  %603 = vmatprep.subr.mxu0 0.0
  %604 = vmatpush1.xpose.msra.mxu0 0.0
  %605 = vmatprep.mubr.f32.mxu0 0.0
  %606 = vmatmul.mubr.f32.gmra.mrb[0].mxu0 %v537
  %v607 = vpop.f32.mrb[0].mxu0
  %v608 = vadd.f32 0.0, %v607
  %v609 = vpop.f32.mrb[0].mxu0
  %610 = vdwg.mxu0
  %v611 = vmul.f32 %v530, 0.35355338
  %v612 = vmul.f32 %v608, 0.35355338
  %v613 = vsel %vm127, %v611, -inf
  %614 = vmax.xlane.f32.xlu0 %v613
  %v615 = vpop.xlane.xlu0 %614
  %v616 = vsel %vm127, %v612, -inf
  %617 = vmax.xlane.f32.xlu0 %v616
  %v618 = vpop.xlane.xlu0 %617
  %v619 = vsub.f32 %v611, %v615
  %v620 = vsub.f32 %v612, %v618
  %v621 = vmul.f32 %v619, 1.442695
  %v622 = vpow.pop %v621
  %v623 = vmul.f32 %v620, 1.442695
  %v624 = vpow.pop %v623
  %v625 = vsel %vm127, %v622, 0.0
  %626 = vadd.xlane.f32.xlu0 %v625
  %v627 = vpop.xlane.xlu0 %626
  %v628 = vsel %vm127, %v624, 0.0
  %629 = vadd.xlane.f32.xlu0 %v628
  %v630 = vpop.xlane.xlu0 %629
  %v631 = vrcp.pop %v627
  %v632 = vrcp.pop %v630
  %v633 = vmul.f32 %v622, %v631
  %v634 = vmul.f32 %v624, %v632
  %635 = vrot.lane.b32.xlu0 %v116, 88
  %v636 = vpop.permute.xlu0 %635
  %v639 = vsel %vm127, %v633, 0
  %641 = vmatprep.subr.mxu0 0.0
  %642 = vmatpush1.msra.mxu0 %v636
  %643 = vmatprep.subr.mxu0 0.0
  %644 = vmatpush1.msra.mxu0 0.0
  %645 = vmatprep.subr.mxu0 0.0
  %646 = vmatpush1.msra.mxu0 0.0
  %647 = vmatprep.subr.mxu0 0.0
  %648 = vmatpush1.msra.mxu0 0.0
  %649 = vmatprep.subr.mxu0 0.0
  %650 = vmatpush1.msra.mxu0 0.0
  %651 = vmatprep.subr.mxu0 0.0
  %652 = vmatpush1.msra.mxu0 0.0
  %653 = vmatprep.subr.mxu0 0.0
  %654 = vmatpush1.msra.mxu0 0.0
  %655 = vmatprep.subr.mxu0 0.0
  %656 = vmatpush1.msra.mxu0 0.0
  %657 = vmatprep.subr.mxu0 0.0
  %658 = vmatpush1.msra.mxu0 0.0
  %659 = vmatprep.subr.mxu0 0.0
  %660 = vmatpush1.msra.mxu0 0.0
  %661 = vmatprep.subr.mxu0 0.0
  %662 = vmatpush1.msra.mxu0 0.0
  %663 = vmatprep.subr.mxu0 0.0
  %664 = vmatpush1.msra.mxu0 0.0
  %665 = vmatprep.subr.mxu0 0.0
  %666 = vmatpush1.msra.mxu0 0.0
  %667 = vmatprep.subr.mxu0 0.0
  %668 = vmatpush1.msra.mxu0 0.0
  %669 = vmatprep.subr.mxu0 0.0
  %670 = vmatpush1.msra.mxu0 0.0
  %671 = vmatprep.subr.mxu0 0.0
  %672 = vmatpush1.msra.mxu0 0.0
  %673 = vmatprep.subr.mxu0 0.0
  %674 = vmatpush1.msra.mxu0 0.0
  %675 = vmatprep.subr.mxu0 0.0
  %676 = vmatpush1.msra.mxu0 0.0
  %677 = vmatprep.subr.mxu0 0.0
  %678 = vmatpush1.msra.mxu0 0.0
  %679 = vmatprep.subr.mxu0 0.0
  %680 = vmatpush1.msra.mxu0 0.0
  %681 = vmatprep.subr.mxu0 0.0
  %682 = vmatpush1.msra.mxu0 0.0
  %683 = vmatprep.subr.mxu0 0.0
  %684 = vmatpush1.msra.mxu0 0.0
  %685 = vmatprep.subr.mxu0 0.0
  %686 = vmatpush1.msra.mxu0 0.0
  %687 = vmatprep.subr.mxu0 0.0
  %688 = vmatpush1.msra.mxu0 0.0
  %689 = vmatprep.subr.mxu0 0.0
  %690 = vmatpush1.msra.mxu0 0.0
  %691 = vmatprep.subr.mxu0 0.0
  %692 = vmatpush1.msra.mxu0 0.0
  %693 = vmatprep.subr.mxu0 0.0
  %694 = vmatpush1.msra.mxu0 0.0
  %695 = vmatprep.subr.mxu0 0.0
  %696 = vmatpush1.msra.mxu0 0.0
  %697 = vmatprep.subr.mxu0 0.0
  %698 = vmatpush1.msra.mxu0 0.0
  %699 = vmatprep.subr.mxu0 0.0
  %700 = vmatpush1.msra.mxu0 0.0
  %701 = vmatprep.subr.mxu0 0.0
  %702 = vmatpush1.msra.mxu0 0.0
  %703 = vmatprep.subr.mxu0 0.0
  %704 = vmatpush1.msra.mxu0 0.0
  %705 = vmatprep.mubr.f32.mxu0 0.0
  %706 = vmatmul.mubr.f32.gmra.mrb[0].mxu0 %v639
  %v707 = vpop.f32.mrb[0].mxu0
  %v708 = vadd.f32 0.0, %v707
  %v709 = vpop.f32.mrb[0].mxu0
  %710 = vdwg.mxu0
  %711 = vrot.lane.b32.xlu0 %v121, 88
  %v712 = vpop.permute.xlu0 %711
  %v715 = vsel %vm127, %v634, 0
  %717 = vmatprep.subr.mxu0 0.0
  %718 = vmatpush1.msra.mxu0 %v712
  %719 = vmatprep.subr.mxu0 0.0
  %720 = vmatpush1.msra.mxu0 0.0
  %721 = vmatprep.subr.mxu0 0.0
  %722 = vmatpush1.msra.mxu0 0.0
  %723 = vmatprep.subr.mxu0 0.0
  %724 = vmatpush1.msra.mxu0 0.0
  %725 = vmatprep.subr.mxu0 0.0
  %726 = vmatpush1.msra.mxu0 0.0
  %727 = vmatprep.subr.mxu0 0.0
  %728 = vmatpush1.msra.mxu0 0.0
  %729 = vmatprep.subr.mxu0 0.0
  %730 = vmatpush1.msra.mxu0 0.0
  %731 = vmatprep.subr.mxu0 0.0
  %732 = vmatpush1.msra.mxu0 0.0
  %733 = vmatprep.subr.mxu0 0.0
  %734 = vmatpush1.msra.mxu0 0.0
  %735 = vmatprep.subr.mxu0 0.0
  %736 = vmatpush1.msra.mxu0 0.0
  %737 = vmatprep.subr.mxu0 0.0
  %738 = vmatpush1.msra.mxu0 0.0
  %739 = vmatprep.subr.mxu0 0.0
  %740 = vmatpush1.msra.mxu0 0.0
  %741 = vmatprep.subr.mxu0 0.0
  %742 = vmatpush1.msra.mxu0 0.0
  %743 = vmatprep.subr.mxu0 0.0
  %744 = vmatpush1.msra.mxu0 0.0
  %745 = vmatprep.subr.mxu0 0.0
  %746 = vmatpush1.msra.mxu0 0.0
  %747 = vmatprep.subr.mxu0 0.0
  %748 = vmatpush1.msra.mxu0 0.0
  %749 = vmatprep.subr.mxu0 0.0
  %750 = vmatpush1.msra.mxu0 0.0
  %751 = vmatprep.subr.mxu0 0.0
  %752 = vmatpush1.msra.mxu0 0.0
  %753 = vmatprep.subr.mxu0 0.0
  %754 = vmatpush1.msra.mxu0 0.0
  %755 = vmatprep.subr.mxu0 0.0
  %756 = vmatpush1.msra.mxu0 0.0
  %757 = vmatprep.subr.mxu0 0.0
  %758 = vmatpush1.msra.mxu0 0.0
  %759 = vmatprep.subr.mxu0 0.0
  %760 = vmatpush1.msra.mxu0 0.0
  %761 = vmatprep.subr.mxu0 0.0
  %762 = vmatpush1.msra.mxu0 0.0
  %763 = vmatprep.subr.mxu0 0.0
  %764 = vmatpush1.msra.mxu0 0.0
  %765 = vmatprep.subr.mxu0 0.0
  %766 = vmatpush1.msra.mxu0 0.0
  %767 = vmatprep.subr.mxu0 0.0
  %768 = vmatpush1.msra.mxu0 0.0
  %769 = vmatprep.subr.mxu0 0.0
  %770 = vmatpush1.msra.mxu0 0.0
  %771 = vmatprep.subr.mxu0 0.0
  %772 = vmatpush1.msra.mxu0 0.0
  %773 = vmatprep.subr.mxu0 0.0
  %774 = vmatpush1.msra.mxu0 0.0
  %775 = vmatprep.subr.mxu0 0.0
  %776 = vmatpush1.msra.mxu0 0.0
  %777 = vmatprep.subr.mxu0 0.0
  %778 = vmatpush1.msra.mxu0 0.0
  %779 = vmatprep.subr.mxu0 0.0
  %780 = vmatpush1.msra.mxu0 0.0
  %781 = vmatprep.mubr.f32.mxu0 0.0
  %782 = vmatmul.mubr.f32.gmra.mrb[0].mxu0 %v715
  %v783 = vpop.f32.mrb[0].mxu0
  %v784 = vadd.f32 0.0, %v783
  %v785 = vpop.f32.mrb[0].mxu0
  %786 = vdwg.mxu0
  %789 = vrot.lane.b32.xlu0 %v708, 8
  %v790 = vpop.permute.xlu0 %789
  %791 = vrot.lane.b32.xlu0 %v784, 8
  %v792 = vpop.permute.xlu0 %791
  %v795 = vsel %vm127, %v376, %v790
  %v796 = vsel %vm127, %v452, %v792
  %v797 = vld [vmem:[%s5 + $0x1] sm:$0x1]
  %v799 = vlaneseq
  %v800 = vshrl.u32 %v799, 7
  %v801 = vsub.s32 0, %v800
  %v802 = vrot.slane %v797, %v801
  %805 = vrot.lane.b32.xlu0 %v23, 80
  %v806 = vpop.permute.xlu0 %805
  %807 = vrot.lane.b32.xlu0 %v24, 80
  %v808 = vpop.permute.xlu0 %807
  %811 = vrot.lane.b32.xlu0 %v802, 80
  %v812 = vpop.permute.xlu0 %811
  %v815 = vsel %vm42, %v795, 0
  %v818 = vsel %vm42, %v796, 0
  %820 = vmatprep.subr.mxu0 0.0
  %821 = vmatpush1.msra.mxu0 %v806
  %822 = vmatprep.subr.mxu0 0.0
  %823 = vmatpush1.msra.mxu0 %v808
  %824 = vmatprep.subr.mxu0 0.0
  %825 = vmatpush1.msra.mxu0 0.0
  %826 = vmatprep.subr.mxu0 0.0
  %827 = vmatpush1.msra.mxu0 0.0
  %828 = vmatprep.subr.mxu0 0.0
  %829 = vmatpush1.msra.mxu0 0.0
  %830 = vmatprep.subr.mxu0 0.0
  %831 = vmatpush1.msra.mxu0 0.0
  %832 = vmatprep.subr.mxu0 0.0
  %833 = vmatpush1.msra.mxu0 0.0
  %834 = vmatprep.subr.mxu0 0.0
  %835 = vmatpush1.msra.mxu0 0.0
  %836 = vmatprep.subr.mxu0 0.0
  %837 = vmatpush1.msra.mxu0 0.0
  %838 = vmatprep.subr.mxu0 0.0
  %839 = vmatpush1.msra.mxu0 0.0
  %840 = vmatprep.subr.mxu0 0.0
  %841 = vmatpush1.msra.mxu0 0.0
  %842 = vmatprep.subr.mxu0 0.0
  %843 = vmatpush1.msra.mxu0 0.0
  %844 = vmatprep.subr.mxu0 0.0
  %845 = vmatpush1.msra.mxu0 0.0
  %846 = vmatprep.subr.mxu0 0.0
  %847 = vmatpush1.msra.mxu0 0.0
  %848 = vmatprep.subr.mxu0 0.0
  %849 = vmatpush1.msra.mxu0 0.0
  %850 = vmatprep.subr.mxu0 0.0
  %851 = vmatpush1.msra.mxu0 0.0
  %852 = vmatprep.subr.mxu0 0.0
  %853 = vmatpush1.msra.mxu0 0.0
  %854 = vmatprep.subr.mxu0 0.0
  %855 = vmatpush1.msra.mxu0 0.0
  %856 = vmatprep.subr.mxu0 0.0
  %857 = vmatpush1.msra.mxu0 0.0
  %858 = vmatprep.subr.mxu0 0.0
  %859 = vmatpush1.msra.mxu0 0.0
  %860 = vmatprep.subr.mxu0 0.0
  %861 = vmatpush1.msra.mxu0 0.0
  %862 = vmatprep.subr.mxu0 0.0
  %863 = vmatpush1.msra.mxu0 0.0
  %864 = vmatprep.subr.mxu0 0.0
  %865 = vmatpush1.msra.mxu0 0.0
  %866 = vmatprep.subr.mxu0 0.0
  %867 = vmatpush1.msra.mxu0 0.0
  %868 = vmatprep.subr.mxu0 0.0
  %869 = vmatpush1.msra.mxu0 0.0
  %870 = vmatprep.subr.mxu0 0.0
  %871 = vmatpush1.msra.mxu0 0.0
  %872 = vmatprep.subr.mxu0 0.0
  %873 = vmatpush1.msra.mxu0 0.0
  %874 = vmatprep.subr.mxu0 0.0
  %875 = vmatpush1.msra.mxu0 0.0
  %876 = vmatprep.subr.mxu0 0.0
  %877 = vmatpush1.msra.mxu0 0.0
  %878 = vmatprep.subr.mxu0 0.0
  %879 = vmatpush1.msra.mxu0 0.0
  %880 = vmatprep.subr.mxu0 0.0
  %881 = vmatpush1.msra.mxu0 0.0
  %882 = vmatprep.subr.mxu0 0.0
  %883 = vmatpush1.msra.mxu0 0.0
  %884 = vmatprep.mubr.f32.mxu0 0.0
  %885 = vmatmul.mubr.f32.gmra.mrb[0].mxu0 %v815
  %v886 = vpop.f32.mrb[0].mxu0
  %v887 = vadd.f32 %v812, %v886
  %v888 = vpop.f32.mrb[0].mxu0
  %889 = vmatprep.mubr.f32.mxu0 0.0
  %890 = vmatmul.mubr.f32.gmra.mrb[0].mxu0 %v818
  %v891 = vpop.f32.mrb[0].mxu0
  %v892 = vadd.f32 %v812, %v891
  %v893 = vpop.f32.mrb[0].mxu0
  %894 = vdwg.mxu0
  %v895 = vadd.f32 %v33, %v887
  %v896 = vadd.f32 %v34, %v892
  %v897 = vsel %vm42, %v895, 0.0
  %898 = vadd.xlane.f32.xlu0 %v897
  %v899 = vpop.xlane.xlu0 %898
  %v900 = vsel %vm42, %v896, 0.0
  %901 = vadd.xlane.f32.xlu0 %v900
  %v902 = vpop.xlane.xlu0 %901
  %v903 = vrcp.pop 16.0
  %v904 = vmul.f32 %v899, %v903
  %v905 = vmul.f32 %v902, %v903
  %v906 = vsub.f32 %v895, %v904
  %v907 = vsub.f32 %v896, %v905
  %v908 = vmul.f32 %v906, %v906
  %v909 = vmul.f32 %v907, %v907
  %v910 = vsel %vm42, %v908, 0.0
  %911 = vadd.xlane.f32.xlu0 %v910
  %v912 = vpop.xlane.xlu0 %911
  %v913 = vsel %vm42, %v909, 0.0
  %914 = vadd.xlane.f32.xlu0 %v913
  %v915 = vpop.xlane.xlu0 %914
  %v916 = vmul.f32 %v912, %v903
  %v917 = vmul.f32 %v915, %v903
  %v918 = vadd.f32 %v916, 1e-05
  %v919 = vadd.f32 %v917, 1e-05
  %v920 = vrsqrt.pop %v918
  %v921 = vrsqrt.pop %v919
  %v922 = vmul.f32 %v906, %v920
  %v923 = vmul.f32 %v907, %v921
  %924 = vrot.lane.b32.xlu0 %v802, 64
  %v925 = vpop.permute.xlu0 %924
  %v927 = vmul.f32 %v922, %v925
  %v928 = vmul.f32 %v923, %v925
  %929 = vrot.lane.b32.xlu0 %v802, 48
  %v930 = vpop.permute.xlu0 %929
  %v932 = vadd.f32 %v927, %v930
  %v933 = vadd.f32 %v928, %v930
  %v934 = vld [vmem:[%s5 + $0x2] sm:$0x1]
  %v936 = vlaneseq
  %v937 = vshrl.u32 %v936, 7
  %v938 = vsub.s32 0, %v937
  %v939 = vrot.slane %v934, %v938
  %941 = vrot.lane.b32.xlu0 %v23, 64
  %v942 = vpop.permute.xlu0 %941
  %943 = vrot.lane.b32.xlu0 %v24, 64
  %v944 = vpop.permute.xlu0 %943
  %v948 = vsel %vm42, %v932, 0
  %v951 = vsel %vm42, %v933, 0
  %953 = vmatprep.subr.mxu0 0.0
  %954 = vmatpush1.msra.mxu0 %v942
  %955 = vmatprep.subr.mxu0 0.0
  %956 = vmatpush1.msra.mxu0 %v944
  %957 = vmatprep.subr.mxu0 0.0
  %958 = vmatpush1.msra.mxu0 0.0
  %959 = vmatprep.subr.mxu0 0.0
  %960 = vmatpush1.msra.mxu0 0.0
  %961 = vmatprep.subr.mxu0 0.0
  %962 = vmatpush1.msra.mxu0 0.0
  %963 = vmatprep.subr.mxu0 0.0
  %964 = vmatpush1.msra.mxu0 0.0
  %965 = vmatprep.subr.mxu0 0.0
  %966 = vmatpush1.msra.mxu0 0.0
  %967 = vmatprep.subr.mxu0 0.0
  %968 = vmatpush1.msra.mxu0 0.0
  %969 = vmatprep.subr.mxu0 0.0
  %970 = vmatpush1.msra.mxu0 0.0
  %971 = vmatprep.subr.mxu0 0.0
  %972 = vmatpush1.msra.mxu0 0.0
  %973 = vmatprep.subr.mxu0 0.0
  %974 = vmatpush1.msra.mxu0 0.0
  %975 = vmatprep.subr.mxu0 0.0
  %976 = vmatpush1.msra.mxu0 0.0
  %977 = vmatprep.subr.mxu0 0.0
  %978 = vmatpush1.msra.mxu0 0.0
  %979 = vmatprep.subr.mxu0 0.0
  %980 = vmatpush1.msra.mxu0 0.0
  %981 = vmatprep.subr.mxu0 0.0
  %982 = vmatpush1.msra.mxu0 0.0
  %983 = vmatprep.subr.mxu0 0.0
  %984 = vmatpush1.msra.mxu0 0.0
  %985 = vmatprep.subr.mxu0 0.0
  %986 = vmatpush1.msra.mxu0 0.0
  %987 = vmatprep.subr.mxu0 0.0
  %988 = vmatpush1.msra.mxu0 0.0
  %989 = vmatprep.subr.mxu0 0.0
  %990 = vmatpush1.msra.mxu0 0.0
  %991 = vmatprep.subr.mxu0 0.0
  %992 = vmatpush1.msra.mxu0 0.0
  %993 = vmatprep.subr.mxu0 0.0
  %994 = vmatpush1.msra.mxu0 0.0
  %995 = vmatprep.subr.mxu0 0.0
  %996 = vmatpush1.msra.mxu0 0.0
  %997 = vmatprep.subr.mxu0 0.0
  %998 = vmatpush1.msra.mxu0 0.0
  %999 = vmatprep.subr.mxu0 0.0
  %1000 = vmatpush1.msra.mxu0 0.0
  %1001 = vmatprep.subr.mxu0 0.0
  %1002 = vmatpush1.msra.mxu0 0.0
  %1003 = vmatprep.subr.mxu0 0.0
  %1004 = vmatpush1.msra.mxu0 0.0
  %1005 = vmatprep.subr.mxu0 0.0
  %1006 = vmatpush1.msra.mxu0 0.0
  %1007 = vmatprep.subr.mxu0 0.0
  %1008 = vmatpush1.msra.mxu0 0.0
  %1009 = vmatprep.subr.mxu0 0.0
  %1010 = vmatpush1.msra.mxu0 0.0
  %1011 = vmatprep.subr.mxu0 0.0
  %1012 = vmatpush1.msra.mxu0 0.0
  %1013 = vmatprep.subr.mxu0 0.0
  %1014 = vmatpush1.msra.mxu0 0.0
  %1015 = vmatprep.subr.mxu0 0.0
  %1016 = vmatpush1.msra.mxu0 0.0
  %1017 = vmatprep.mubr.f32.mxu0 0.0
  %1018 = vmatmul.mubr.f32.gmra.mrb[0].mxu0 %v948
  %v1019 = vpop.f32.mrb[0].mxu0
  %v1020 = vadd.f32 %v939, %v1019
  %v1021 = vpop.f32.mrb[0].mxu0
  %1022 = vmatprep.mubr.f32.mxu0 0.0
  %1023 = vmatmul.mubr.f32.gmra.mrb[0].mxu0 %v951
  %v1024 = vpop.f32.mrb[0].mxu0
  %v1025 = vadd.f32 %v939, %v1024
  %v1026 = vpop.f32.mrb[0].mxu0
  %1027 = vdwg.mxu0
  %v1028 = vmax.f32 %v1020, 0.0
  %v1029 = vmax.f32 %v1025, 0.0
  %1030 = vrot.lane.b32.xlu0 %v939, 96
  %v1031 = vpop.permute.xlu0 %1030
  %vm1033 = vcmask 261120
  %v1035 = vsel %vm1033, %v1028, 0
  %v1038 = vsel %vm1033, %v1029, 0
  %1040 = vmatprep.subr.mxu0 0.0
  %1041 = vmatpush1.msra.mxu0 %v25
  %1042 = vmatprep.subr.mxu0 0.0
  %1043 = vmatpush1.msra.mxu0 %v26
  %1044 = vmatprep.subr.mxu0 0.0
  %1045 = vmatpush1.msra.mxu0 %v27
  %1046 = vmatprep.subr.mxu0 0.0
  %1047 = vmatpush1.msra.mxu0 %v28
  %1048 = vmatprep.subr.mxu0 0.0
  %1049 = vmatpush1.msra.mxu0 0.0
  %1050 = vmatprep.subr.mxu0 0.0
  %1051 = vmatpush1.msra.mxu0 0.0
  %1052 = vmatprep.subr.mxu0 0.0
  %1053 = vmatpush1.msra.mxu0 0.0
  %1054 = vmatprep.subr.mxu0 0.0
  %1055 = vmatpush1.msra.mxu0 0.0
  %1056 = vmatprep.subr.mxu0 0.0
  %1057 = vmatpush1.msra.mxu0 0.0
  %1058 = vmatprep.subr.mxu0 0.0
  %1059 = vmatpush1.msra.mxu0 0.0
  %1060 = vmatprep.subr.mxu0 0.0
  %1061 = vmatpush1.msra.mxu0 0.0
  %1062 = vmatprep.subr.mxu0 0.0
  %1063 = vmatpush1.msra.mxu0 0.0
  %1064 = vmatprep.subr.mxu0 0.0
  %1065 = vmatpush1.msra.mxu0 0.0
  %1066 = vmatprep.subr.mxu0 0.0
  %1067 = vmatpush1.msra.mxu0 0.0
  %1068 = vmatprep.subr.mxu0 0.0
  %1069 = vmatpush1.msra.mxu0 0.0
  %1070 = vmatprep.subr.mxu0 0.0
  %1071 = vmatpush1.msra.mxu0 0.0
  %1072 = vmatprep.subr.mxu0 0.0
  %1073 = vmatpush1.msra.mxu0 0.0
  %1074 = vmatprep.subr.mxu0 0.0
  %1075 = vmatpush1.msra.mxu0 0.0
  %1076 = vmatprep.subr.mxu0 0.0
  %1077 = vmatpush1.msra.mxu0 0.0
  %1078 = vmatprep.subr.mxu0 0.0
  %1079 = vmatpush1.msra.mxu0 0.0
  %1080 = vmatprep.subr.mxu0 0.0
  %1081 = vmatpush1.msra.mxu0 0.0
  %1082 = vmatprep.subr.mxu0 0.0
  %1083 = vmatpush1.msra.mxu0 0.0
  %1084 = vmatprep.subr.mxu0 0.0
  %1085 = vmatpush1.msra.mxu0 0.0
  %1086 = vmatprep.subr.mxu0 0.0
  %1087 = vmatpush1.msra.mxu0 0.0
  %1088 = vmatprep.subr.mxu0 0.0
  %1089 = vmatpush1.msra.mxu0 0.0
  %1090 = vmatprep.subr.mxu0 0.0
  %1091 = vmatpush1.msra.mxu0 0.0
  %1092 = vmatprep.subr.mxu0 0.0
  %1093 = vmatpush1.msra.mxu0 0.0
  %1094 = vmatprep.subr.mxu0 0.0
  %1095 = vmatpush1.msra.mxu0 0.0
  %1096 = vmatprep.subr.mxu0 0.0
  %1097 = vmatpush1.msra.mxu0 0.0
  %1098 = vmatprep.subr.mxu0 0.0
  %1099 = vmatpush1.msra.mxu0 0.0
  %1100 = vmatprep.subr.mxu0 0.0
  %1101 = vmatpush1.msra.mxu0 0.0
  %1102 = vmatprep.subr.mxu0 0.0
  %1103 = vmatpush1.msra.mxu0 0.0
  %1104 = vmatprep.mubr.f32.mxu0 0.0
  %1105 = vmatmul.mubr.f32.gmra.mrb[0].mxu0 %v1035
  %v1106 = vpop.f32.mrb[0].mxu0
  %v1107 = vadd.f32 %v1031, %v1106
  %v1108 = vpop.f32.mrb[0].mxu0
  %1109 = vmatprep.mubr.f32.mxu0 0.0
  %1110 = vmatmul.mubr.f32.gmra.mrb[0].mxu0 %v1038
  %v1111 = vpop.f32.mrb[0].mxu0
  %v1112 = vadd.f32 %v1031, %v1111
  %v1113 = vpop.f32.mrb[0].mxu0
  %1114 = vdwg.mxu0
  %v1115 = vadd.f32 %v932, %v1107
  %v1116 = vadd.f32 %v933, %v1112
  %v1117 = vsel %vm42, %v1115, 0.0
  %1118 = vadd.xlane.f32.xlu0 %v1117
  %v1119 = vpop.xlane.xlu0 %1118
  %v1120 = vsel %vm42, %v1116, 0.0
  %1121 = vadd.xlane.f32.xlu0 %v1120
  %v1122 = vpop.xlane.xlu0 %1121
  %v1123 = vmul.f32 %v1119, %v903
  %v1124 = vmul.f32 %v1122, %v903
  %v1125 = vsub.f32 %v1115, %v1123
  %v1126 = vsub.f32 %v1116, %v1124
  %v1127 = vmul.f32 %v1125, %v1125
  %v1128 = vmul.f32 %v1126, %v1126
  %v1129 = vsel %vm42, %v1127, 0.0
  %1130 = vadd.xlane.f32.xlu0 %v1129
  %v1131 = vpop.xlane.xlu0 %1130
  %v1132 = vsel %vm42, %v1128, 0.0
  %1133 = vadd.xlane.f32.xlu0 %v1132
  %v1134 = vpop.xlane.xlu0 %1133
  %v1135 = vmul.f32 %v1131, %v903
  %v1136 = vmul.f32 %v1134, %v903
  %v1137 = vadd.f32 %v1135, 1e-05
  %v1138 = vadd.f32 %v1136, 1e-05
  %v1139 = vrsqrt.pop %v1137
  %v1140 = vrsqrt.pop %v1138
  %v1141 = vmul.f32 %v1125, %v1139
  %v1142 = vmul.f32 %v1126, %v1140
  %1143 = vrot.lane.b32.xlu0 %v802, 32
  %v1144 = vpop.permute.xlu0 %1143
  %v1146 = vmul.f32 %v1141, %v1144
  %v1147 = vmul.f32 %v1142, %v1144
  %1148 = vrot.lane.b32.xlu0 %v802, 16
  %v1149 = vpop.permute.xlu0 %1148
  %v1151 = vadd.f32 %v1146, %v1149
  %v1152 = vadd.f32 %v1147, %v1149
  %v1154 = vrot.slane %v1151, 1
  %1155 = vrot.lane.b32.xlu0 %v1154, 16
  %v1156 = vpop.permute.xlu0 %1155
  %v1158 = vrot.slane %v1151, 2
  %1159 = vrot.lane.b32.xlu0 %v1158, 32
  %v1160 = vpop.permute.xlu0 %1159
  %v1162 = vrot.slane %v1151, 3
  %1163 = vrot.lane.b32.xlu0 %v1162, 48
  %v1164 = vpop.permute.xlu0 %1163
  %v1166 = vrot.slane %v1151, 4
  %1167 = vrot.lane.b32.xlu0 %v1166, 64
  %v1168 = vpop.permute.xlu0 %1167
  %v1170 = vrot.slane %v1151, 5
  %1171 = vrot.lane.b32.xlu0 %v1170, 80
  %v1172 = vpop.permute.xlu0 %1171
  %v1174 = vrot.slane %v1151, 6
  %1175 = vrot.lane.b32.xlu0 %v1174, 96
  %v1176 = vpop.permute.xlu0 %1175
  %v1178 = vrot.slane %v1151, 7
  %1179 = vrot.lane.b32.xlu0 %v1178, 112
  %v1180 = vpop.permute.xlu0 %1179
  %v1182 = vsel %vm42, %v1151, %v1156
  %v1183 = vsel %vm1033, %v1182, %v1160
  %vm1184 = vcmask 392192
  %v1185 = vsel %vm1184, %v1183, %v1164
  %vm1186 = vcmask 523264
  %v1187 = vsel %vm1186, %v1185, %v1168
  %vm1188 = vcmask 654336
  %v1189 = vsel %vm1188, %v1187, %v1172
  %vm1190 = vcmask 785408
  %v1191 = vsel %vm1190, %v1189, %v1176
  %vm1192 = vcmask 916480
  %v1193 = vsel %vm1192, %v1191, %v1180
  %v1195 = vrot.slane %v1152, 1
  %1196 = vrot.lane.b32.xlu0 %v1195, 16
  %v1197 = vpop.permute.xlu0 %1196
  %v1199 = vrot.slane %v1152, 2
  %1200 = vrot.lane.b32.xlu0 %v1199, 32
  %v1201 = vpop.permute.xlu0 %1200
  %v1203 = vrot.slane %v1152, 3
  %1204 = vrot.lane.b32.xlu0 %v1203, 48
  %v1205 = vpop.permute.xlu0 %1204
  %v1207 = vrot.slane %v1152, 4
  %1208 = vrot.lane.b32.xlu0 %v1207, 64
  %v1209 = vpop.permute.xlu0 %1208
  %v1211 = vrot.slane %v1152, 5
  %1212 = vrot.lane.b32.xlu0 %v1211, 80
  %v1213 = vpop.permute.xlu0 %1212
  %v1215 = vrot.slane %v1152, 6
  %1216 = vrot.lane.b32.xlu0 %v1215, 96
  %v1217 = vpop.permute.xlu0 %1216
  %v1219 = vrot.slane %v1152, 7
  %1220 = vrot.lane.b32.xlu0 %v1219, 112
  %v1221 = vpop.permute.xlu0 %1220
  %v1223 = vsel %vm42, %v1152, %v1197
  %v1224 = vsel %vm1033, %v1223, %v1201
  %v1225 = vsel %vm1184, %v1224, %v1205
  %v1226 = vsel %vm1186, %v1225, %v1209
  %v1227 = vsel %vm1188, %v1226, %v1213
  %v1228 = vsel %vm1190, %v1227, %v1217
  %v1229 = vsel %vm1192, %v1228, %v1221
  %v1231 = vrot.slane %v1229, 7
  %vm1233 = vcmask 1040384
  %v1234 = vsel %vm1233, %v1193, %v1231
  %v1235 = vld [vmem:[%s3] sm:$0xff]
  %v1236 = vld [vmem:[%s3 + $0x8] sm:$0xff]
  %v1237 = vld [vmem:[%s3 + $0x10] sm:$0xff]
  %v1238 = vld [vmem:[%s3 + $0x18] sm:$0xff]
  %v1239 = vld [vmem:[%s3 + $0x20] sm:$0xff]
  %v1240 = vld [vmem:[%s3 + $0x28] sm:$0xff]
  %v1241 = vld [vmem:[%s3 + $0x30] sm:$0xff]
  %v1242 = vld [vmem:[%s3 + $0x38] sm:$0xff]
  %v1243 = vld [vmem:[%s3 + $0x40] sm:$0xff]
  %v1244 = vld [vmem:[%s3 + $0x48] sm:$0xff]
  %v1245 = vld [vmem:[%s3 + $0x50] sm:$0xff]
  %v1246 = vld [vmem:[%s3 + $0x58] sm:$0xff]
  %v1247 = vld [vmem:[%s3 + $0x60] sm:$0xff]
  %v1248 = vld [vmem:[%s3 + $0x68] sm:$0xff]
  %v1249 = vld [vmem:[%s3 + $0x70] sm:$0xff]
  %v1250 = vld [vmem:[%s3 + $0x78] sm:$0xff]
  %1251 = vrot.lane.b32.xlu0 %v939, 80
  %v1252 = vpop.permute.xlu0 %1251
  %1254 = vmatprep.subr.mxu0 0.0
  %1255 = vmatpush1.msra.mxu0 %v1235
  %1256 = vmatprep.subr.mxu0 0.0
  %1257 = vmatpush1.msra.mxu0 %v1236
  %1258 = vmatprep.subr.mxu0 0.0
  %1259 = vmatpush1.msra.mxu0 %v1237
  %1260 = vmatprep.subr.mxu0 0.0
  %1261 = vmatpush1.msra.mxu0 %v1238
  %1262 = vmatprep.subr.mxu0 0.0
  %1263 = vmatpush1.msra.mxu0 %v1239
  %1264 = vmatprep.subr.mxu0 0.0
  %1265 = vmatpush1.msra.mxu0 %v1240
  %1266 = vmatprep.subr.mxu0 0.0
  %1267 = vmatpush1.msra.mxu0 %v1241
  %1268 = vmatprep.subr.mxu0 0.0
  %1269 = vmatpush1.msra.mxu0 %v1242
  %1270 = vmatprep.subr.mxu0 0.0
  %1271 = vmatpush1.msra.mxu0 %v1243
  %1272 = vmatprep.subr.mxu0 0.0
  %1273 = vmatpush1.msra.mxu0 %v1244
  %1274 = vmatprep.subr.mxu0 0.0
  %1275 = vmatpush1.msra.mxu0 %v1245
  %1276 = vmatprep.subr.mxu0 0.0
  %1277 = vmatpush1.msra.mxu0 %v1246
  %1278 = vmatprep.subr.mxu0 0.0
  %1279 = vmatpush1.msra.mxu0 %v1247
  %1280 = vmatprep.subr.mxu0 0.0
  %1281 = vmatpush1.msra.mxu0 %v1248
  %1282 = vmatprep.subr.mxu0 0.0
  %1283 = vmatpush1.msra.mxu0 %v1249
  %1284 = vmatprep.subr.mxu0 0.0
  %1285 = vmatpush1.msra.mxu0 %v1250
  %1286 = vmatprep.subr.mxu0 0.0
  %1287 = vmatpush1.msra.mxu0 0.0
  %1288 = vmatprep.subr.mxu0 0.0
  %1289 = vmatpush1.msra.mxu0 0.0
  %1290 = vmatprep.subr.mxu0 0.0
  %1291 = vmatpush1.msra.mxu0 0.0
  %1292 = vmatprep.subr.mxu0 0.0
  %1293 = vmatpush1.msra.mxu0 0.0
  %1294 = vmatprep.subr.mxu0 0.0
  %1295 = vmatpush1.msra.mxu0 0.0
  %1296 = vmatprep.subr.mxu0 0.0
  %1297 = vmatpush1.msra.mxu0 0.0
  %1298 = vmatprep.subr.mxu0 0.0
  %1299 = vmatpush1.msra.mxu0 0.0
  %1300 = vmatprep.subr.mxu0 0.0
  %1301 = vmatpush1.msra.mxu0 0.0
  %1302 = vmatprep.subr.mxu0 0.0
  %1303 = vmatpush1.msra.mxu0 0.0
  %1304 = vmatprep.subr.mxu0 0.0
  %1305 = vmatpush1.msra.mxu0 0.0
  %1306 = vmatprep.subr.mxu0 0.0
  %1307 = vmatpush1.msra.mxu0 0.0
  %1308 = vmatprep.subr.mxu0 0.0
  %1309 = vmatpush1.msra.mxu0 0.0
  %1310 = vmatprep.subr.mxu0 0.0
  %1311 = vmatpush1.msra.mxu0 0.0
  %1312 = vmatprep.subr.mxu0 0.0
  %1313 = vmatpush1.msra.mxu0 0.0
  %1314 = vmatprep.subr.mxu0 0.0
  %1315 = vmatpush1.msra.mxu0 0.0
  %1316 = vmatprep.subr.mxu0 0.0
  %1317 = vmatpush1.msra.mxu0 0.0
  %1318 = vmatprep.mubr.f32.mxu0 0.0
  %1319 = vmatmul.mubr.f32.gmra.mrb[0].mxu0 %v1234
  %v1320 = vpop.f32.mrb[0].mxu0
  %v1321 = vadd.f32 %v1252, %v1320
  %v1322 = vpop.f32.mrb[0].mxu0
  %1323 = vdwg.mxu0
  %vm1324 = vcmp.gt.f32.partialorder %v1321, 0.0
  %v1325 = vmul.f32 %v1321, 0.01
  %v1326 = vsel %vm1324, %v1321, %v1325
  %1331 = vrot.lane.b32.xlu0 %v25, 112
  %v1332 = vpop.permute.xlu0 %1331
  %1333 = vrot.lane.b32.xlu0 %v26, 112
  %v1334 = vpop.permute.xlu0 %1333
  %1335 = vrot.lane.b32.xlu0 %v27, 112
  %v1336 = vpop.permute.xlu0 %1335
  %1337 = vrot.lane.b32.xlu0 %v28, 112
  %v1338 = vpop.permute.xlu0 %1337
  %1343 = vrot.lane.b32.xlu0 %v939, 48
  %v1344 = vpop.permute.xlu0 %1343
  %v1347 = vsel %vm1033, %v1326, 0
  %1349 = vmatprep.subr.mxu0 0.0
  %1350 = vmatpush1.msra.mxu0 %v1332
  %1351 = vmatprep.subr.mxu0 0.0
  %1352 = vmatpush1.msra.mxu0 %v1334
  %1353 = vmatprep.subr.mxu0 0.0
  %1354 = vmatpush1.msra.mxu0 %v1336
  %1355 = vmatprep.subr.mxu0 0.0
  %1356 = vmatpush1.msra.mxu0 %v1338
  %1357 = vmatprep.subr.mxu0 0.0
  %1358 = vmatpush1.msra.mxu0 0.0
  %1359 = vmatprep.subr.mxu0 0.0
  %1360 = vmatpush1.msra.mxu0 0.0
  %1361 = vmatprep.subr.mxu0 0.0
  %1362 = vmatpush1.msra.mxu0 0.0
  %1363 = vmatprep.subr.mxu0 0.0
  %1364 = vmatpush1.msra.mxu0 0.0
  %1365 = vmatprep.subr.mxu0 0.0
  %1366 = vmatpush1.msra.mxu0 0.0
  %1367 = vmatprep.subr.mxu0 0.0
  %1368 = vmatpush1.msra.mxu0 0.0
  %1369 = vmatprep.subr.mxu0 0.0
  %1370 = vmatpush1.msra.mxu0 0.0
  %1371 = vmatprep.subr.mxu0 0.0
  %1372 = vmatpush1.msra.mxu0 0.0
  %1373 = vmatprep.subr.mxu0 0.0
  %1374 = vmatpush1.msra.mxu0 0.0
  %1375 = vmatprep.subr.mxu0 0.0
  %1376 = vmatpush1.msra.mxu0 0.0
  %1377 = vmatprep.subr.mxu0 0.0
  %1378 = vmatpush1.msra.mxu0 0.0
  %1379 = vmatprep.subr.mxu0 0.0
  %1380 = vmatpush1.msra.mxu0 0.0
  %1381 = vmatprep.subr.mxu0 0.0
  %1382 = vmatpush1.msra.mxu0 0.0
  %1383 = vmatprep.subr.mxu0 0.0
  %1384 = vmatpush1.msra.mxu0 0.0
  %1385 = vmatprep.subr.mxu0 0.0
  %1386 = vmatpush1.msra.mxu0 0.0
  %1387 = vmatprep.subr.mxu0 0.0
  %1388 = vmatpush1.msra.mxu0 0.0
  %1389 = vmatprep.subr.mxu0 0.0
  %1390 = vmatpush1.msra.mxu0 0.0
  %1391 = vmatprep.subr.mxu0 0.0
  %1392 = vmatpush1.msra.mxu0 0.0
  %1393 = vmatprep.subr.mxu0 0.0
  %1394 = vmatpush1.msra.mxu0 0.0
  %1395 = vmatprep.subr.mxu0 0.0
  %1396 = vmatpush1.msra.mxu0 0.0
  %1397 = vmatprep.subr.mxu0 0.0
  %1398 = vmatpush1.msra.mxu0 0.0
  %1399 = vmatprep.subr.mxu0 0.0
  %1400 = vmatpush1.msra.mxu0 0.0
  %1401 = vmatprep.subr.mxu0 0.0
  %1402 = vmatpush1.msra.mxu0 0.0
  %1403 = vmatprep.subr.mxu0 0.0
  %1404 = vmatpush1.msra.mxu0 0.0
  %1405 = vmatprep.subr.mxu0 0.0
  %1406 = vmatpush1.msra.mxu0 0.0
  %1407 = vmatprep.subr.mxu0 0.0
  %1408 = vmatpush1.msra.mxu0 0.0
  %1409 = vmatprep.subr.mxu0 0.0
  %1410 = vmatpush1.msra.mxu0 0.0
  %1411 = vmatprep.subr.mxu0 0.0
  %1412 = vmatpush1.msra.mxu0 0.0
  %1413 = vmatprep.mubr.f32.mxu0 0.0
  %1414 = vmatmul.mubr.f32.gmra.mrb[0].mxu0 %v1347
  %v1415 = vpop.f32.mrb[0].mxu0
  %v1416 = vadd.f32 %v1344, %v1415
  %v1417 = vpop.f32.mrb[0].mxu0
  %1418 = vdwg.mxu0
  %vm1419 = vcmp.gt.f32.partialorder %v1416, 0.0
  %v1420 = vmul.f32 %v1416, 0.01
  %v1421 = vsel %vm1419, %v1416, %v1420
  %v1422 = vld [vmem:[%s5] sm:$0x1]
  %v1424 = vlaneseq
  %v1425 = vshrl.u32 %v1424, 7
  %v1426 = vsub.s32 0, %v1425
  %v1427 = vrot.slane %v1422, %v1426
  %1433 = vrot.lane.b32.xlu0 %v25, 80
  %v1434 = vpop.permute.xlu0 %1433
  %1435 = vrot.lane.b32.xlu0 %v29, 80
  %v1436 = vpop.permute.xlu0 %1435
  %1437 = vrot.lane.b32.xlu0 %v26, 80
  %v1438 = vpop.permute.xlu0 %1437
  %1439 = vrot.lane.b32.xlu0 %v30, 80
  %v1440 = vpop.permute.xlu0 %1439
  %1441 = vrot.lane.b32.xlu0 %v27, 80
  %v1442 = vpop.permute.xlu0 %1441
  %1443 = vrot.lane.b32.xlu0 %v31, 80
  %v1444 = vpop.permute.xlu0 %1443
  %1445 = vrot.lane.b32.xlu0 %v28, 80
  %v1446 = vpop.permute.xlu0 %1445
  %1447 = vrot.lane.b32.xlu0 %v32, 80
  %v1448 = vpop.permute.xlu0 %1447
  %v1449 = vsel %vm1188, %v1434, %v1436
  %v1450 = vsel %vm1188, %v1438, %v1440
  %v1451 = vsel %vm1188, %v1442, %v1444
  %v1452 = vsel %vm1188, %v1446, %v1448
  %v1458 = vsel %vm1033, %v1421, 0
  %1460 = vmatprep.subr.mxu0 0.0
  %1461 = vmatpush1.msra.mxu0 %v1449
  %1462 = vmatprep.subr.mxu0 0.0
  %1463 = vmatpush1.msra.mxu0 %v1450
  %1464 = vmatprep.subr.mxu0 0.0
  %1465 = vmatpush1.msra.mxu0 %v1451
  %1466 = vmatprep.subr.mxu0 0.0
  %1467 = vmatpush1.msra.mxu0 %v1452
  %1468 = vmatprep.subr.mxu0 0.0
  %1469 = vmatpush1.msra.mxu0 0.0
  %1470 = vmatprep.subr.mxu0 0.0
  %1471 = vmatpush1.msra.mxu0 0.0
  %1472 = vmatprep.subr.mxu0 0.0
  %1473 = vmatpush1.msra.mxu0 0.0
  %1474 = vmatprep.subr.mxu0 0.0
  %1475 = vmatpush1.msra.mxu0 0.0
  %1476 = vmatprep.subr.mxu0 0.0
  %1477 = vmatpush1.msra.mxu0 0.0
  %1478 = vmatprep.subr.mxu0 0.0
  %1479 = vmatpush1.msra.mxu0 0.0
  %1480 = vmatprep.subr.mxu0 0.0
  %1481 = vmatpush1.msra.mxu0 0.0
  %1482 = vmatprep.subr.mxu0 0.0
  %1483 = vmatpush1.msra.mxu0 0.0
  %1484 = vmatprep.subr.mxu0 0.0
  %1485 = vmatpush1.msra.mxu0 0.0
  %1486 = vmatprep.subr.mxu0 0.0
  %1487 = vmatpush1.msra.mxu0 0.0
  %1488 = vmatprep.subr.mxu0 0.0
  %1489 = vmatpush1.msra.mxu0 0.0
  %1490 = vmatprep.subr.mxu0 0.0
  %1491 = vmatpush1.msra.mxu0 0.0
  %1492 = vmatprep.subr.mxu0 0.0
  %1493 = vmatpush1.msra.mxu0 0.0
  %1494 = vmatprep.subr.mxu0 0.0
  %1495 = vmatpush1.msra.mxu0 0.0
  %1496 = vmatprep.subr.mxu0 0.0
  %1497 = vmatpush1.msra.mxu0 0.0
  %1498 = vmatprep.subr.mxu0 0.0
  %1499 = vmatpush1.msra.mxu0 0.0
  %1500 = vmatprep.subr.mxu0 0.0
  %1501 = vmatpush1.msra.mxu0 0.0
  %1502 = vmatprep.subr.mxu0 0.0
  %1503 = vmatpush1.msra.mxu0 0.0
  %1504 = vmatprep.subr.mxu0 0.0
  %1505 = vmatpush1.msra.mxu0 0.0
  %1506 = vmatprep.subr.mxu0 0.0
  %1507 = vmatpush1.msra.mxu0 0.0
  %1508 = vmatprep.subr.mxu0 0.0
  %1509 = vmatpush1.msra.mxu0 0.0
  %1510 = vmatprep.subr.mxu0 0.0
  %1511 = vmatpush1.msra.mxu0 0.0
  %1512 = vmatprep.subr.mxu0 0.0
  %1513 = vmatpush1.msra.mxu0 0.0
  %1514 = vmatprep.subr.mxu0 0.0
  %1515 = vmatpush1.msra.mxu0 0.0
  %1516 = vmatprep.subr.mxu0 0.0
  %1517 = vmatpush1.msra.mxu0 0.0
  %1518 = vmatprep.subr.mxu0 0.0
  %1519 = vmatpush1.msra.mxu0 0.0
  %1520 = vmatprep.subr.mxu0 0.0
  %1521 = vmatpush1.msra.mxu0 0.0
  %1522 = vmatprep.subr.mxu0 0.0
  %1523 = vmatpush1.msra.mxu0 0.0
  %1524 = vmatprep.mubr.f32.mxu0 0.0
  %1525 = vmatmul.mubr.f32.gmra.mrb[0].mxu0 %v1458
  %v1526 = vpop.f32.mrb[0].mxu0
  %v1527 = vadd.f32 %v1427, %v1526
  %v1528 = vpop.f32.mrb[0].mxu0
  %1529 = vdwg.mxu0
  %v1530 = vld [vmem:[%s4] sm:$0xff]
  %v1531 = vld [vmem:[%s4 + $0x8] sm:$0xff]
  %v1533 = vrot.slane %v1527, 7
  %1534 = vrot.lane.b32.xlu0 %v1533, 112
  %v1535 = vpop.permute.xlu0 %1534
  %v1537 = vrot.slane %v1527, 6
  %1538 = vrot.lane.b32.xlu0 %v1537, 96
  %v1539 = vpop.permute.xlu0 %1538
  %v1541 = vrot.slane %v1527, 5
  %1542 = vrot.lane.b32.xlu0 %v1541, 80
  %v1543 = vpop.permute.xlu0 %1542
  %v1545 = vrot.slane %v1527, 4
  %1546 = vrot.lane.b32.xlu0 %v1545, 64
  %v1547 = vpop.permute.xlu0 %1546
  %v1549 = vrot.slane %v1527, 3
  %1550 = vrot.lane.b32.xlu0 %v1549, 48
  %v1551 = vpop.permute.xlu0 %1550
  %v1553 = vrot.slane %v1527, 2
  %1554 = vrot.lane.b32.xlu0 %v1553, 32
  %v1555 = vpop.permute.xlu0 %1554
  %v1557 = vrot.slane %v1527, 1
  %1558 = vrot.lane.b32.xlu0 %v1557, 16
  %v1559 = vpop.permute.xlu0 %1558
  %v1561 = vsel %vm1233, %v1527, %v1535
  %vm1562 = vcmask 1041408
  %v1563 = vsel %vm1562, %v1561, %v1539
  %vm1564 = vcmask 1042432
  %v1565 = vsel %vm1564, %v1563, %v1543
  %vm1566 = vcmask 1043456
  %v1567 = vsel %vm1566, %v1565, %v1547
  %vm1568 = vcmask 1044480
  %v1569 = vsel %vm1568, %v1567, %v1551
  %vm1570 = vcmask 1045504
  %v1571 = vsel %vm1570, %v1569, %v1555
  %vm1572 = vcmask 1046528
  %v1573 = vsel %vm1572, %v1571, %v1559
  %v1575 = vsel %vm42, %v1573, 0
  %1577 = vmatprep.subr.mxu0 0.0
  %1578 = vmatpush1.msra.mxu0 %v1530
  %1579 = vmatprep.subr.mxu0 0.0
  %1580 = vmatpush1.msra.mxu0 %v1531
  %1581 = vmatprep.subr.mxu0 0.0
  %1582 = vmatpush1.msra.mxu0 0.0
  %1583 = vmatprep.subr.mxu0 0.0
  %1584 = vmatpush1.msra.mxu0 0.0
  %1585 = vmatprep.subr.mxu0 0.0
  %1586 = vmatpush1.msra.mxu0 0.0
  %1587 = vmatprep.subr.mxu0 0.0
  %1588 = vmatpush1.msra.mxu0 0.0
  %1589 = vmatprep.subr.mxu0 0.0
  %1590 = vmatpush1.msra.mxu0 0.0
  %1591 = vmatprep.subr.mxu0 0.0
  %1592 = vmatpush1.msra.mxu0 0.0
  %1593 = vmatprep.subr.mxu0 0.0
  %1594 = vmatpush1.msra.mxu0 0.0
  %1595 = vmatprep.subr.mxu0 0.0
  %1596 = vmatpush1.msra.mxu0 0.0
  %1597 = vmatprep.subr.mxu0 0.0
  %1598 = vmatpush1.msra.mxu0 0.0
  %1599 = vmatprep.subr.mxu0 0.0
  %1600 = vmatpush1.msra.mxu0 0.0
  %1601 = vmatprep.subr.mxu0 0.0
  %1602 = vmatpush1.msra.mxu0 0.0
  %1603 = vmatprep.subr.mxu0 0.0
  %1604 = vmatpush1.msra.mxu0 0.0
  %1605 = vmatprep.subr.mxu0 0.0
  %1606 = vmatpush1.msra.mxu0 0.0
  %1607 = vmatprep.subr.mxu0 0.0
  %1608 = vmatpush1.msra.mxu0 0.0
  %1609 = vmatprep.subr.mxu0 0.0
  %1610 = vmatpush1.msra.mxu0 0.0
  %1611 = vmatprep.subr.mxu0 0.0
  %1612 = vmatpush1.msra.mxu0 0.0
  %1613 = vmatprep.subr.mxu0 0.0
  %1614 = vmatpush1.msra.mxu0 0.0
  %1615 = vmatprep.subr.mxu0 0.0
  %1616 = vmatpush1.msra.mxu0 0.0
  %1617 = vmatprep.subr.mxu0 0.0
  %1618 = vmatpush1.msra.mxu0 0.0
  %1619 = vmatprep.subr.mxu0 0.0
  %1620 = vmatpush1.msra.mxu0 0.0
  %1621 = vmatprep.subr.mxu0 0.0
  %1622 = vmatpush1.msra.mxu0 0.0
  %1623 = vmatprep.subr.mxu0 0.0
  %1624 = vmatpush1.msra.mxu0 0.0
  %1625 = vmatprep.subr.mxu0 0.0
  %1626 = vmatpush1.msra.mxu0 0.0
  %1627 = vmatprep.subr.mxu0 0.0
  %1628 = vmatpush1.msra.mxu0 0.0
  %1629 = vmatprep.subr.mxu0 0.0
  %1630 = vmatpush1.msra.mxu0 0.0
  %1631 = vmatprep.subr.mxu0 0.0
  %1632 = vmatpush1.msra.mxu0 0.0
  %1633 = vmatprep.subr.mxu0 0.0
  %1634 = vmatpush1.msra.mxu0 0.0
  %1635 = vmatprep.subr.mxu0 0.0
  %1636 = vmatpush1.msra.mxu0 0.0
  %1637 = vmatprep.subr.mxu0 0.0
  %1638 = vmatpush1.msra.mxu0 0.0
  %1639 = vmatprep.subr.mxu0 0.0
  %1640 = vmatpush1.msra.mxu0 0.0
  %1641 = vmatprep.mubr.f32.mxu0 0.0
  %1642 = vmatmul.mubr.f32.gmra.mrb[0].mxu0 %v1575
  %v1643 = vpop.f32.mrb[0].mxu0
  %v1644 = vadd.f32 0.0, %v1643
  %v1645 = vpop.f32.mrb[0].mxu0
  %1646 = vdwg.mxu0
  %v1647 = vmax.f32 %v1644, 0.0
  %1648 = vrot.lane.b32.xlu0 %v939, 16
  %v1649 = vpop.permute.xlu0 %1648
  %v1651 = vmul.f32 %v1647, %v1649
  %vm1652 = vcmask 31744
  %v1653 = vsel %vm1652, %v1651, -inf
  %1654 = vmax.xlane.f32.xlu0 %v1653
  %v1655 = vpop.xlane.xlu0 %1654
  %v1656 = vsub.f32 %v1651, %v1655
  %v1657 = vmul.f32 %v1656, 1.442695
  %v1658 = vpow.pop %v1657
  %v1659 = vsel %vm1652, %v1658, 0.0
  %1660 = vadd.xlane.f32.xlu0 %v1659
  %v1661 = vpop.xlane.xlu0 %1660
  %v1662 = vrcp.pop %v1661
  %v1663 = vmul.f32 %v1658, %v1662
  %1665 = vset.pattern.permute.xlu0 0
  %1666 = vperm.xlu0 %1665, %v1663
  %v1667 = vpop.permute.xlu0 %1666
  %v1669 = vmul.f32 %v1667, %v1573
  %v1670 = vsel %vm42, %v1669, 0.0
  %v1671 = vrot.slane %v1670, 4
  %v1672 = vadd.f32 %v1670, %v1671
  %v1673 = vrot.slane %v1672, 2
  %v1674 = vadd.f32 %v1672, %v1673
  %v1675 = vrot.slane %v1674, 1
  %v1676 = vadd.f32 %v1674, %v1675
  %1677 = vset.pattern.permute.xlu0 1
  %1678 = vperm.xlu0 %1677, %v1663
  %v1679 = vpop.permute.xlu0 %1678
  %v1681 = vmul.f32 %v1679, %v1573
  %v1682 = vsel %vm42, %v1681, 0.0
  %v1683 = vrot.slane %v1682, 4
  %v1684 = vadd.f32 %v1682, %v1683
  %v1685 = vrot.slane %v1684, 2
  %v1686 = vadd.f32 %v1684, %v1685
  %v1687 = vrot.slane %v1686, 1
  %v1688 = vadd.f32 %v1686, %v1687
  %1689 = vset.pattern.permute.xlu0 2
  %1690 = vperm.xlu0 %1689, %v1663
  %v1691 = vpop.permute.xlu0 %1690
  %v1693 = vmul.f32 %v1691, %v1573
  %v1694 = vsel %vm42, %v1693, 0.0
  %v1695 = vrot.slane %v1694, 4
  %v1696 = vadd.f32 %v1694, %v1695
  %v1697 = vrot.slane %v1696, 2
  %v1698 = vadd.f32 %v1696, %v1697
  %v1699 = vrot.slane %v1698, 1
  %v1700 = vadd.f32 %v1698, %v1699
  %1701 = vset.pattern.permute.xlu0 3
  %1702 = vperm.xlu0 %1701, %v1663
  %v1703 = vpop.permute.xlu0 %1702
  %v1705 = vmul.f32 %v1703, %v1573
  %v1706 = vsel %vm42, %v1705, 0.0
  %v1707 = vrot.slane %v1706, 4
  %v1708 = vadd.f32 %v1706, %v1707
  %v1709 = vrot.slane %v1708, 2
  %v1710 = vadd.f32 %v1708, %v1709
  %v1711 = vrot.slane %v1710, 1
  %v1712 = vadd.f32 %v1710, %v1711
  %1714 = vrot.lane.b32.xlu0 %v1688, 16
  %v1715 = vpop.permute.xlu0 %1714
  %1718 = vrot.lane.b32.xlu0 %v1700, 32
  %v1719 = vpop.permute.xlu0 %1718
  %1722 = vrot.lane.b32.xlu0 %v1712, 48
  %v1723 = vpop.permute.xlu0 %1722
  %v1725 = vsel %vm42, %v1676, %v1715
  %v1726 = vsel %vm1033, %v1725, %v1719
  %v1727 = vsel %vm1184, %v1726, %v1723
  %v1728 = vrot.slane %v1663, 1
  %1729 = vrot.lane.b32.xlu0 %v1728, 4
  %v1730 = vpop.permute.xlu0 %1729
  %v1732 = vrot.slane %v1663, 2
  %1733 = vrot.lane.b32.xlu0 %v1732, 8
  %v1734 = vpop.permute.xlu0 %1733
  %v1736 = vrot.slane %v1663, 3
  %1737 = vrot.lane.b32.xlu0 %v1736, 12
  %v1738 = vpop.permute.xlu0 %1737
  %v1740 = vrot.slane %v1663, 4
  %1741 = vrot.lane.b32.xlu0 %v1740, 16
  %v1742 = vpop.permute.xlu0 %1741
  %v1744 = vrot.slane %v1663, 5
  %1745 = vrot.lane.b32.xlu0 %v1744, 20
  %v1746 = vpop.permute.xlu0 %1745
  %v1748 = vrot.slane %v1663, 6
  %1749 = vrot.lane.b32.xlu0 %v1748, 24
  %v1750 = vpop.permute.xlu0 %1749
  %v1752 = vrot.slane %v1663, 7
  %1753 = vrot.lane.b32.xlu0 %v1752, 28
  %v1754 = vpop.permute.xlu0 %1753
  %v1756 = vsel %vm1652, %v1663, %v1730
  %v1757 = vsel %vm127, %v1756, %v1734
  %vm1758 = vcmask 97280
  %v1759 = vsel %vm1758, %v1757, %v1738
  %v1760 = vsel %vm42, %v1759, %v1742
  %vm1761 = vcmask 162816
  %v1762 = vsel %vm1761, %v1760, %v1746
  %vm1763 = vcmask 195584
  %v1764 = vsel %vm1763, %v1762, %v1750
  %vm1765 = vcmask 228352
  %v1766 = vsel %vm1765, %v1764, %v1754
  %1768 = vrot.lane.b32.xlu0 %v1766, 64
  %v1769 = vpop.permute.xlu0 %1768
  %v1771 = vsel %vm1186, %v1727, %v1769
  %v1772 = vsel %vm1190, %v1771, 0.0
  %1774 = vrot.lane.b32.xlu0 %v1527, 112
  %v1775 = vpop.permute.xlu0 %1774
  %1777 = vrot.lane.b32.xlu0 %v1533, 96
  %v1778 = vpop.permute.xlu0 %1777
  %1780 = vrot.lane.b32.xlu0 %v1537, 80
  %v1781 = vpop.permute.xlu0 %1780
  %1783 = vrot.lane.b32.xlu0 %v1541, 64
  %v1784 = vpop.permute.xlu0 %1783
  %1786 = vrot.lane.b32.xlu0 %v1545, 48
  %v1787 = vpop.permute.xlu0 %1786
  %1789 = vrot.lane.b32.xlu0 %v1549, 32
  %v1790 = vpop.permute.xlu0 %1789
  %1792 = vrot.lane.b32.xlu0 %v1553, 16
  %v1793 = vpop.permute.xlu0 %1792
  %v1795 = vsel %vm1233, %v1557, %v1775
  %v1796 = vsel %vm1562, %v1795, %v1778
  %v1797 = vsel %vm1564, %v1796, %v1781
  %v1798 = vsel %vm1566, %v1797, %v1784
  %v1799 = vsel %vm1568, %v1798, %v1787
  %v1800 = vsel %vm1570, %v1799, %v1790
  %v1801 = vsel %vm1572, %v1800, %v1793
  %v1803 = vsel %vm42, %v1801, 0
  %1805 = vmatprep.subr.mxu0 0.0
  %1806 = vmatpush1.msra.mxu0 %v1530
  %1807 = vmatprep.subr.mxu0 0.0
  %1808 = vmatpush1.msra.mxu0 %v1531
  %1809 = vmatprep.subr.mxu0 0.0
  %1810 = vmatpush1.msra.mxu0 0.0
  %1811 = vmatprep.subr.mxu0 0.0
  %1812 = vmatpush1.msra.mxu0 0.0
  %1813 = vmatprep.subr.mxu0 0.0
  %1814 = vmatpush1.msra.mxu0 0.0
  %1815 = vmatprep.subr.mxu0 0.0
  %1816 = vmatpush1.msra.mxu0 0.0
  %1817 = vmatprep.subr.mxu0 0.0
  %1818 = vmatpush1.msra.mxu0 0.0
  %1819 = vmatprep.subr.mxu0 0.0
  %1820 = vmatpush1.msra.mxu0 0.0
  %1821 = vmatprep.subr.mxu0 0.0
  %1822 = vmatpush1.msra.mxu0 0.0
  %1823 = vmatprep.subr.mxu0 0.0
  %1824 = vmatpush1.msra.mxu0 0.0
  %1825 = vmatprep.subr.mxu0 0.0
  %1826 = vmatpush1.msra.mxu0 0.0
  %1827 = vmatprep.subr.mxu0 0.0
  %1828 = vmatpush1.msra.mxu0 0.0
  %1829 = vmatprep.subr.mxu0 0.0
  %1830 = vmatpush1.msra.mxu0 0.0
  %1831 = vmatprep.subr.mxu0 0.0
  %1832 = vmatpush1.msra.mxu0 0.0
  %1833 = vmatprep.subr.mxu0 0.0
  %1834 = vmatpush1.msra.mxu0 0.0
  %1835 = vmatprep.subr.mxu0 0.0
  %1836 = vmatpush1.msra.mxu0 0.0
  %1837 = vmatprep.subr.mxu0 0.0
  %1838 = vmatpush1.msra.mxu0 0.0
  %1839 = vmatprep.subr.mxu0 0.0
  %1840 = vmatpush1.msra.mxu0 0.0
  %1841 = vmatprep.subr.mxu0 0.0
  %1842 = vmatpush1.msra.mxu0 0.0
  %1843 = vmatprep.subr.mxu0 0.0
  %1844 = vmatpush1.msra.mxu0 0.0
  %1845 = vmatprep.subr.mxu0 0.0
  %1846 = vmatpush1.msra.mxu0 0.0
  %1847 = vmatprep.subr.mxu0 0.0
  %1848 = vmatpush1.msra.mxu0 0.0
  %1849 = vmatprep.subr.mxu0 0.0
  %1850 = vmatpush1.msra.mxu0 0.0
  %1851 = vmatprep.subr.mxu0 0.0
  %1852 = vmatpush1.msra.mxu0 0.0
  %1853 = vmatprep.subr.mxu0 0.0
  %1854 = vmatpush1.msra.mxu0 0.0
  %1855 = vmatprep.subr.mxu0 0.0
  %1856 = vmatpush1.msra.mxu0 0.0
  %1857 = vmatprep.subr.mxu0 0.0
  %1858 = vmatpush1.msra.mxu0 0.0
  %1859 = vmatprep.subr.mxu0 0.0
  %1860 = vmatpush1.msra.mxu0 0.0
  %1861 = vmatprep.subr.mxu0 0.0
  %1862 = vmatpush1.msra.mxu0 0.0
  %1863 = vmatprep.subr.mxu0 0.0
  %1864 = vmatpush1.msra.mxu0 0.0
  %1865 = vmatprep.subr.mxu0 0.0
  %1866 = vmatpush1.msra.mxu0 0.0
  %1867 = vmatprep.subr.mxu0 0.0
  %1868 = vmatpush1.msra.mxu0 0.0
  %1869 = vmatprep.mubr.f32.mxu0 0.0
  %1870 = vmatmul.mubr.f32.gmra.mrb[0].mxu0 %v1803
  %v1871 = vpop.f32.mrb[0].mxu0
  %v1872 = vadd.f32 0.0, %v1871
  %v1873 = vpop.f32.mrb[0].mxu0
  %1874 = vdwg.mxu0
  %v1875 = vmax.f32 %v1872, 0.0
  %v1876 = vmul.f32 %v1875, %v1649
  %v1877 = vsel %vm1652, %v1876, -inf
  %1878 = vmax.xlane.f32.xlu0 %v1877
  %v1879 = vpop.xlane.xlu0 %1878
  %v1880 = vsub.f32 %v1876, %v1879
  %v1881 = vmul.f32 %v1880, 1.442695
  %v1882 = vpow.pop %v1881
  %v1883 = vsel %vm1652, %v1882, 0.0
  %1884 = vadd.xlane.f32.xlu0 %v1883
  %v1885 = vpop.xlane.xlu0 %1884
  %v1886 = vrcp.pop %v1885
  %v1887 = vmul.f32 %v1882, %v1886
  %1889 = vset.pattern.permute.xlu0 0
  %1890 = vperm.xlu0 %1889, %v1887
  %v1891 = vpop.permute.xlu0 %1890
  %v1893 = vmul.f32 %v1891, %v1801
  %v1894 = vsel %vm42, %v1893, 0.0
  %v1895 = vrot.slane %v1894, 4
  %v1896 = vadd.f32 %v1894, %v1895
  %v1897 = vrot.slane %v1896, 2
  %v1898 = vadd.f32 %v1896, %v1897
  %v1899 = vrot.slane %v1898, 1
  %v1900 = vadd.f32 %v1898, %v1899
  %1901 = vset.pattern.permute.xlu0 1
  %1902 = vperm.xlu0 %1901, %v1887
  %v1903 = vpop.permute.xlu0 %1902
  %v1905 = vmul.f32 %v1903, %v1801
  %v1906 = vsel %vm42, %v1905, 0.0
  %v1907 = vrot.slane %v1906, 4
  %v1908 = vadd.f32 %v1906, %v1907
  %v1909 = vrot.slane %v1908, 2
  %v1910 = vadd.f32 %v1908, %v1909
  %v1911 = vrot.slane %v1910, 1
  %v1912 = vadd.f32 %v1910, %v1911
  %1913 = vset.pattern.permute.xlu0 2
  %1914 = vperm.xlu0 %1913, %v1887
  %v1915 = vpop.permute.xlu0 %1914
  %v1917 = vmul.f32 %v1915, %v1801
  %v1918 = vsel %vm42, %v1917, 0.0
  %v1919 = vrot.slane %v1918, 4
  %v1920 = vadd.f32 %v1918, %v1919
  %v1921 = vrot.slane %v1920, 2
  %v1922 = vadd.f32 %v1920, %v1921
  %v1923 = vrot.slane %v1922, 1
  %v1924 = vadd.f32 %v1922, %v1923
  %1925 = vset.pattern.permute.xlu0 3
  %1926 = vperm.xlu0 %1925, %v1887
  %v1927 = vpop.permute.xlu0 %1926
  %v1929 = vmul.f32 %v1927, %v1801
  %v1930 = vsel %vm42, %v1929, 0.0
  %v1931 = vrot.slane %v1930, 4
  %v1932 = vadd.f32 %v1930, %v1931
  %v1933 = vrot.slane %v1932, 2
  %v1934 = vadd.f32 %v1932, %v1933
  %v1935 = vrot.slane %v1934, 1
  %v1936 = vadd.f32 %v1934, %v1935
  %1938 = vrot.lane.b32.xlu0 %v1912, 16
  %v1939 = vpop.permute.xlu0 %1938
  %1942 = vrot.lane.b32.xlu0 %v1924, 32
  %v1943 = vpop.permute.xlu0 %1942
  %1946 = vrot.lane.b32.xlu0 %v1936, 48
  %v1947 = vpop.permute.xlu0 %1946
  %v1949 = vsel %vm42, %v1900, %v1939
  %v1950 = vsel %vm1033, %v1949, %v1943
  %v1951 = vsel %vm1184, %v1950, %v1947
  %v1952 = vrot.slane %v1887, 1
  %1953 = vrot.lane.b32.xlu0 %v1952, 4
  %v1954 = vpop.permute.xlu0 %1953
  %v1956 = vrot.slane %v1887, 2
  %1957 = vrot.lane.b32.xlu0 %v1956, 8
  %v1958 = vpop.permute.xlu0 %1957
  %v1960 = vrot.slane %v1887, 3
  %1961 = vrot.lane.b32.xlu0 %v1960, 12
  %v1962 = vpop.permute.xlu0 %1961
  %v1964 = vrot.slane %v1887, 4
  %1965 = vrot.lane.b32.xlu0 %v1964, 16
  %v1966 = vpop.permute.xlu0 %1965
  %v1968 = vrot.slane %v1887, 5
  %1969 = vrot.lane.b32.xlu0 %v1968, 20
  %v1970 = vpop.permute.xlu0 %1969
  %v1972 = vrot.slane %v1887, 6
  %1973 = vrot.lane.b32.xlu0 %v1972, 24
  %v1974 = vpop.permute.xlu0 %1973
  %v1976 = vrot.slane %v1887, 7
  %1977 = vrot.lane.b32.xlu0 %v1976, 28
  %v1978 = vpop.permute.xlu0 %1977
  %v1980 = vsel %vm1652, %v1887, %v1954
  %v1981 = vsel %vm127, %v1980, %v1958
  %v1982 = vsel %vm1758, %v1981, %v1962
  %v1983 = vsel %vm42, %v1982, %v1966
  %v1984 = vsel %vm1761, %v1983, %v1970
  %v1985 = vsel %vm1763, %v1984, %v1974
  %v1986 = vsel %vm1765, %v1985, %v1978
  %1988 = vrot.lane.b32.xlu0 %v1986, 64
  %v1989 = vpop.permute.xlu0 %1988
  %v1991 = vsel %vm1186, %v1951, %v1989
  %v1992 = vsel %vm1190, %v1991, 0.0
  %v1994 = vrot.slane %v1992, 7
  %v1996 = vsel %vm1233, %v1772, %v1994
  %1997 = vst [vmem:[%s6] sm:$0x3] %v1996
  // Predicated region
  $region26: #{trans_pooling_encoder.1} parent=0 // pred_check
    _
  $region27: #{trans_pooling_encoder.1} parent=0 // pred_check_branch
    %1999 = sbr.rel (0) target = $region29
  $region28: #{trans_pooling_encoder.1} parent=0 // pred_region
    _
  $region29: #{trans_pooling_encoder.1} parent=0 // pred_fallthru
    _
  // Predicated region
  $region30: #{trans_pooling_encoder.1} parent=0 // pred_check
    _
  $region31: #{trans_pooling_encoder.1} parent=0 // pred_check_branch
    %2001 = sbr.rel (0) target = $region33
  $region32: #{trans_pooling_encoder.1} parent=0 // pred_region
    _
  $region33: #{trans_pooling_encoder.1} parent=0 // pred_fallthru
    _

</llo_original>
